<compile_context>
chip_gen: v7x
topology: tpu7x:2x2x1
jax: 0.10.0
libtpu: 0.0.40
codegen_flags: <defaults>
</compile_context>

<pallas_src>
import functools

import jax
import jax.numpy as jnp
from jax.experimental import pallas as pl
from jax.experimental.pallas import tpu as pltpu


def _round_up(v, m):
    return -(-v // m) * m


# ----------------------------------------------------------------------------
# Fused kernel for one batch tile (NB samples).
#
# Activation layout (per tile): row = (h*R + w)*NB + n, channels on the lane
# axis, with R = round_up8(W_out of conv[0]).  With this layout
#   * tap (i, j) of a stride-1 conv needs input rows offset by the constant
#     base = (i*R + j)*NB, i.e. ONE contiguous window per tap ("junk-row"
#     trick); rows whose w-index exceeds the valid width are junk and are
#     never read by later stages,
#   * all NB samples of one spatial position are contiguous rows, so fc1 can
#     gather the valid positions with NB-row slices and lane-concat them.
# ----------------------------------------------------------------------------
def _dqn_fused_kernel(*refs, cfg):
    nb, R, rows0 = cfg["nb"], cfg["R"], cfg["rows0"]
    meta = cfg["meta"]
    n_conv = len(meta)

    x_ref = refs[0]
    conv_w = [refs[1 + 2 * l] for l in range(n_conv)]          # (k*k*Cin, Cout)
    conv_b = [refs[2 + 2 * l] for l in range(n_conv)]          # (1, Cout)
    fw1_ref, fb1_ref, fw2_ref, fb2_ref = refs[1 + 2 * n_conv:5 + 2 * n_conv]
    o_ref = refs[5 + 2 * n_conv]
    act = list(refs[6 + 2 * n_conv:])                          # VMEM scratches

    # ---- conv[0]: host-built im2col rows -> single matmul for the whole tile
    y = jnp.dot(x_ref[...], conv_w[0][...], preferred_element_type=jnp.float32)
    act[0][pl.ds(0, rows0), :] = jnp.maximum(y + conv_b[0][...], 0.0)
    pad0 = act[0].shape[0] - rows0
    if pad0:   # keep the over-read tail finite (it only ever feeds junk rows)
        act[0][pl.ds(rows0, pad0), :] = jnp.zeros(
            (pad0, act[0].shape[1]), jnp.float32)

    # ---- conv[1:]: stride-1 layers, k*k taps fused onto the contraction axis
    for l in range(1, n_conv):
        ksz = meta[l][0]
        s_out = act[l].shape[0]
        taps = [act[l - 1][pl.ds((i * R + j) * nb, s_out), :]
                for i in range(ksz) for j in range(ksz)]
        lhs = jnp.concatenate(taps, axis=-1)                   # (s_out, k*k*Cin)
        y = jnp.dot(lhs, conv_w[l][...], preferred_element_type=jnp.float32)
        act[l][...] = jnp.maximum(y + conv_b[l][...], 0.0)

    # ---- fc1: lane-concat the valid spatial positions -> single matmul
    ho_l, wo_l = meta[-1][2], meta[-1][3]
    pieces = [act[-1][pl.ds((hh * R + ww) * nb, nb), :]
              for hh in range(ho_l) for ww in range(wo_l)]
    flat = jnp.concatenate(pieces, axis=-1)                    # (NB, HO*WO*C)
    h = jnp.maximum(
        jnp.dot(flat, fw1_ref[...], preferred_element_type=jnp.float32)
        + fb1_ref[...], 0.0)

    # ---- fc2 (lane-padded output, single store)
    out = jnp.dot(h, fw2_ref[...], preferred_element_type=jnp.float32)
    o_ref[...] = (out + fb2_ref[...]).astype(o_ref.dtype)


# ----------------------------------------------------------------------------
# One-time parameter repacking (PyTorch layout -> kernel layout).
# ----------------------------------------------------------------------------
def prepare_params(params, input_shape, n_batch):
    nb = n_batch if n_batch <= 8 else 8
    # TODO(synk): pad the batch on the host when it is not a tile multiple.
    assert n_batch % nb == 0

    c_in, h, w = input_shape
    cin = c_in
    meta = []                                   # (ksz, stride, ho, wo, cin, cout)
    conv_w, conv_b = [], []
    for idx, layer in enumerate(params["conv"]):
        wgt, bias, stride = layer["w"], layer["b"], layer["stride"]
        cout, _, ksz, _ = wgt.shape
        if idx > 0:
            assert stride == 1, "TODO(synk): stride > 1 only supported for conv[0]"
        ho = (h - ksz) // stride + 1
        wo = (w - ksz) // stride + 1
        meta.append((ksz, stride, ho, wo, cin, cout))
        # contraction-axis order = (tap, cin), tap = i*k + j
        conv_w.append(jnp.asarray(wgt).transpose(2, 3, 1, 0)
                      .reshape(ksz * ksz * cin, cout))
        conv_b.append(jnp.asarray(bias).reshape(1, cout))
        cin, h, w = cout, ho, wo

    n_conv = len(meta)
    R = _round_up(meta[0][3], 8)                # shared padded row stride
    rows0 = meta[0][2] * R * nb                 # conv[0] output rows per tile

    # activation scratch row counts, sized back to front
    S = [0] * n_conv
    ho_l, wo_l = meta[-1][2], meta[-1][3]
    S[-1] = _round_up(((ho_l - 1) * R + wo_l - 1) * nb + nb, 8)
    for l in range(n_conv - 2, -1, -1):
        k_next = meta[l + 1][0]
        S[l] = _round_up(((k_next - 1) * R + (k_next - 1)) * nb + S[l + 1], 8)
    S[0] = max(S[0], rows0)

    fc_units = params["fc1_w"].shape[1]
    n_actions = params["fc2_w"].shape[1]
    n_act_pad = _round_up(n_actions, 128)

    # fc1 rows: PyTorch view(N, -1) order is (C, H, W); repack to (pos, C).
    fw1 = (jnp.asarray(params["fc1_w"])
           .reshape(cin, ho_l * wo_l, fc_units)
           .transpose(1, 0, 2)
           .reshape(ho_l * wo_l * cin, fc_units))
    fb1 = jnp.asarray(params["fc1_b"]).reshape(1, fc_units)
    fw2 = jnp.zeros((fc_units, n_act_pad), jnp.float32)
    fw2 = fw2.at[:, :n_actions].set(jnp.asarray(params["fc2_w"]))
    fb2 = jnp.zeros((1, n_act_pad), jnp.float32)
    fb2 = fb2.at[:, :n_actions].set(jnp.asarray(params["fc2_b"]).reshape(1, -1))

    packed = {"conv_w": conv_w, "conv_b": conv_b,
              "fw1": fw1, "fb1": fb1, "fw2": fw2, "fb2": fb2}
    cfg = {"nb": nb, "R": R, "rows0": rows0, "meta": tuple(meta),
           "S": tuple(S), "n_actions": n_actions, "n_act_pad": n_act_pad}
    return packed, cfg


def _prep_input(x, cfg):
    """NCHW input -> conv[0] im2col rows, tile-major / sample-minor layout:
    global row = ((tile*HO + h)*R + w)*NB + s, lanes = (tap, Cin)."""
    ksz, stride, ho, wo, cin, _ = cfg["meta"][0]
    nb, R = cfg["nb"], cfg["R"]
    n = x.shape[0]
    taps = []
    for i in range(ksz):
        for j in range(ksz):
            taps.append(x[:, :, i:i + stride * (ho - 1) + 1:stride,
                            j:j + stride * (wo - 1) + 1:stride])
    p = jnp.stack(taps, axis=-1)                 # (N, C, HO, WO, k*k)
    p = p.transpose(0, 2, 3, 4, 1)               # (N, HO, WO, k*k, C)
    p = p.reshape(n, ho, wo, ksz * ksz * cin)
    p = jnp.pad(p, ((0, 0), (0, 0), (0, R - wo), (0, 0)))
    t = n // nb
    p = p.reshape(t, nb, ho, R, ksz * ksz * cin).transpose(0, 2, 3, 1, 4)
    return p.reshape(t * ho * R * nb, ksz * ksz * cin)


def dqn_fused_forward(packed, x, *, cfg):
    """x: (N, C, H, W) float32 -> Q-values (N, n_actions) float32."""
    n = x.shape[0]
    nb = cfg["nb"]
    assert n % nb == 0
    t = n // nb
    meta = cfg["meta"]
    x_rows = _prep_input(x.astype(jnp.float32), cfg)
    rows_per_tile = meta[0][2] * cfg["R"] * nb
    k_in = x_rows.shape[1]

    inputs = [x_rows]
    for wgt, bias in zip(packed["conv_w"], packed["conv_b"]):
        inputs += [wgt, bias]
    inputs += [packed["fw1"], packed["fb1"], packed["fw2"], packed["fb2"]]

    in_specs = [pl.BlockSpec((rows_per_tile, k_in), lambda b: (b, 0))]
    in_specs += [pl.BlockSpec(a.shape, lambda b: (0, 0)) for a in inputs[1:]]
    out_specs = pl.BlockSpec((nb, cfg["n_act_pad"]), lambda b: (b, 0))
    out_shape = jax.ShapeDtypeStruct((n, cfg["n_act_pad"]), jnp.float32)

    scratch = [pltpu.VMEM((s, m[5]), jnp.float32)
               for s, m in zip(cfg["S"], meta)]

    kernel = functools.partial(_dqn_fused_kernel, cfg=cfg)
    out = pl.pallas_call(
        kernel,
        out_shape=out_shape,
        grid=(t,),
        in_specs=in_specs,
        out_specs=out_specs,
        scratch_shapes=scratch,
        compiler_params=pltpu.CompilerParams(
            dimension_semantics=("parallel",)),
    )(*inputs)
    return out[:, :cfg["n_actions"]]


# ----------------------------------------------------------------------------
# Parameter init (PyTorch layout) and a pure-JAX reference for verification.
# ----------------------------------------------------------------------------
def init_dqn_params(key, input_shape, n_actions, conv_layers, fc_units):
    params = {"conv": []}
    in_ch = input_shape[0]
    h, w = input_shape[1], input_shape[2]
    for cfg in conv_layers:
        key, k1, k2 = jax.random.split(key, 3)
        cout, ks, st = cfg["out_channels"], cfg["kernel_size"], cfg["stride"]
        fan_in = in_ch * ks * ks
        scale = 1.0 / jnp.sqrt(fan_in)
        params["conv"].append({
            "w": jax.random.uniform(k1, (cout, in_ch, ks, ks), jnp.float32,
                                    -scale, scale),
            "b": jax.random.uniform(k2, (cout,), jnp.float32, -scale, scale),
            "stride": st,
        })
        in_ch = cout
        h = (h - ks) // st + 1
        w = (w - ks) // st + 1
    conv_out = in_ch * h * w

    key, k1, k2, k3, k4 = jax.random.split(key, 5)
    s1 = 1.0 / jnp.sqrt(conv_out)
    s2 = 1.0 / jnp.sqrt(fc_units)
    params["fc1_w"] = jax.random.uniform(k1, (conv_out, fc_units), jnp.float32, -s1, s1)
    params["fc1_b"] = jax.random.uniform(k2, (fc_units,), jnp.float32, -s1, s1)
    params["fc2_w"] = jax.random.uniform(k3, (fc_units, n_actions), jnp.float32, -s2, s2)
    params["fc2_b"] = jax.random.uniform(k4, (n_actions,), jnp.float32, -s2, s2)
    return params


def dqn_reference(params, x):
    for layer in params["conv"]:
        y = jax.lax.conv_general_dilated(
            x, layer["w"], window_strides=(layer["stride"], layer["stride"]),
            padding="VALID", dimension_numbers=("NCHW", "OIHW", "NCHW"))
        x = jnp.maximum(y + layer["b"][None, :, None, None], 0.0)
    n = x.shape[0]
    x = x.reshape(n, -1)
    x = jnp.maximum(x @ params["fc1_w"] + params["fc1_b"], 0.0)
    return x @ params["fc2_w"] + params["fc2_b"]


if __name__ == "__main__":
    # Small shapes consistent with the DQN module: input (4, 16, 16), batch 2.
    input_shape = (4, 16, 16)
    n_actions = 6
    fc_units = 32
    conv_layers = [
        {"out_channels": 8, "kernel_size": 4, "stride": 2},   # 16 -> 7
        {"out_channels": 16, "kernel_size": 3, "stride": 1},  # 7 -> 5
    ]

    key = jax.random.PRNGKey(0)
    key, pkey, xkey = jax.random.split(key, 3)
    params = init_dqn_params(pkey, input_shape, n_actions, conv_layers, fc_units)
    x = jax.random.normal(xkey, (2, *input_shape), jnp.float32)

    packed, cfg = prepare_params(params, input_shape, x.shape[0])
    fwd = jax.jit(functools.partial(dqn_fused_forward, cfg=cfg))

    out = jax.block_until_ready(fwd(packed, x))
    ref = jax.block_until_ready(dqn_reference(params, x))

    assert out.shape == (2, n_actions), out.shape
    assert jnp.allclose(out, ref, atol=1e-4, rtol=1e-4), (out, ref)
    print("KERNEL_OK")
</pallas_src>

<mosaic_0001>
module attributes {stable_mosaic.version = 11 : i64} {
  func.func @_dqn_fused_kernel(%arg0: i32, %arg1: memref<112x64xf32, #tpu.memory_space<vmem>>, %arg2: memref<64x8xf32, #tpu.memory_space<vmem>>, %arg3: memref<1x8xf32, #tpu.memory_space<vmem>>, %arg4: memref<72x16xf32, #tpu.memory_space<vmem>>, %arg5: memref<1x16xf32, #tpu.memory_space<vmem>>, %arg6: memref<400x32xf32, #tpu.memory_space<vmem>>, %arg7: memref<1x32xf32, #tpu.memory_space<vmem>>, %arg8: memref<32x128xf32, #tpu.memory_space<vmem>>, %arg9: memref<1x128xf32, #tpu.memory_space<vmem>>, %arg10: memref<2x128xf32, #tpu.memory_space<vmem>>, %arg11: memref<120x8xf32, #tpu.memory_space<vmem>>, %arg12: memref<80x16xf32, #tpu.memory_space<vmem>>) attributes {dimension_semantics = [#tpu.dimension_semantics<parallel>], iteration_bounds = array<i64: 1>, scalar_prefetch = 0 : i64, scratch_operands = 2 : i64, tpu.core_type = #tpu.core_type<tc>, window_params = [{transform_indices = @transform_0, window_bounds = array<i64: 112, 64>}, {pipeline_mode = #tpu.pipeline_mode<synchronous>, transform_indices = @transform_1, window_bounds = array<i64: 64, 8>}, {pipeline_mode = #tpu.pipeline_mode<synchronous>, transform_indices = @transform_2, window_bounds = array<i64: 1, 8>}, {pipeline_mode = #tpu.pipeline_mode<synchronous>, transform_indices = @transform_3, window_bounds = array<i64: 72, 16>}, {pipeline_mode = #tpu.pipeline_mode<synchronous>, transform_indices = @transform_4, window_bounds = array<i64: 1, 16>}, {pipeline_mode = #tpu.pipeline_mode<synchronous>, transform_indices = @transform_5, window_bounds = array<i64: 400, 32>}, {pipeline_mode = #tpu.pipeline_mode<synchronous>, transform_indices = @transform_6, window_bounds = array<i64: 1, 32>}, {pipeline_mode = #tpu.pipeline_mode<synchronous>, transform_indices = @transform_7, window_bounds = array<i64: 32, 128>}, {pipeline_mode = #tpu.pipeline_mode<synchronous>, transform_indices = @transform_8, window_bounds = array<i64: 1, 128>}, {transform_indices = @transform_9, window_bounds = array<i64: 2, 128>}]} {
    %c0 = arith.constant 0 : index
    %c0_0 = arith.constant 0 : index
    %0 = vector.load %arg1[%c0, %c0_0] : memref<112x64xf32, #tpu.memory_space<vmem>>, vector<112x64xf32>
    %c0_1 = arith.constant 0 : index
    %c0_2 = arith.constant 0 : index
    %1 = vector.load %arg2[%c0_1, %c0_2] : memref<64x8xf32, #tpu.memory_space<vmem>>, vector<64x8xf32>
    %cst = arith.constant dense<0.000000e+00> : vector<112x8xf32>
    %2 = tpu.matmul %0, %1, %cst {dimension_numbers = #tpu.dot_dimension_numbers<[1], [0], [0], [1], [0, 0, 1, 1], [], []>} : vector<112x64xf32>, vector<64x8xf32>, vector<112x8xf32> -> vector<112x8xf32>
    %c0_3 = arith.constant 0 : index
    %c0_4 = arith.constant 0 : index
    %3 = vector.load %arg3[%c0_3, %c0_4] : memref<1x8xf32, #tpu.memory_space<vmem>>, vector<1x8xf32>
    %4 = vector.broadcast %3 : vector<1x8xf32> to vector<112x8xf32>
    %5 = arith.addf %2, %4 : vector<112x8xf32>
    %cst_5 = arith.constant 0.000000e+00 : f32
    %6 = vector.broadcast %cst_5 : f32 to vector<112x8xf32>
    %7 = arith.maximumf %5, %6 : vector<112x8xf32>
    %c0_6 = arith.constant 0 : index
    %c0_7 = arith.constant 0 : index
    %8 = vector.load %arg11[%c0_6, %c0_7] : memref<120x8xf32, #tpu.memory_space<vmem>>, vector<112x8xf32>
    tpu.vector_store %arg11[%c0_6, %c0_7], %7 {strides = array<i32>} : memref<120x8xf32, #tpu.memory_space<vmem>>, vector<112x8xf32>,
    %cst_8 = arith.constant 0.000000e+00 : f32
    %9 = vector.broadcast %cst_8 : f32 to vector<8x8xf32>
    %c112 = arith.constant 112 : index
    %c0_9 = arith.constant 0 : index
    %10 = vector.load %arg11[%c112, %c0_9] : memref<120x8xf32, #tpu.memory_space<vmem>>, vector<8x8xf32>
    tpu.vector_store %arg11[%c112, %c0_9], %9 {strides = array<i32>} : memref<120x8xf32, #tpu.memory_space<vmem>>, vector<8x8xf32>,
    %c0_10 = arith.constant 0 : index
    %c0_11 = arith.constant 0 : index
    %11 = vector.load %arg11[%c0_10, %c0_11] : memref<120x8xf32, #tpu.memory_space<vmem>>, vector<80x8xf32>
    %c2 = arith.constant 2 : index
    %c0_12 = arith.constant 0 : index
    %12 = vector.load %arg11[%c2, %c0_12] : memref<120x8xf32, #tpu.memory_space<vmem>>, vector<80x8xf32>
    %c4 = arith.constant 4 : index
    %c0_13 = arith.constant 0 : index
    %13 = vector.load %arg11[%c4, %c0_13] : memref<120x8xf32, #tpu.memory_space<vmem>>, vector<80x8xf32>
    %c16 = arith.constant 16 : index
    %c0_14 = arith.constant 0 : index
    %14 = vector.load %arg11[%c16, %c0_14] : memref<120x8xf32, #tpu.memory_space<vmem>>, vector<80x8xf32>
    %c18 = arith.constant 18 : index
    %c0_15 = arith.constant 0 : index
    %15 = vector.load %arg11[%c18, %c0_15] : memref<120x8xf32, #tpu.memory_space<vmem>>, vector<80x8xf32>
    %c20 = arith.constant 20 : index
    %c0_16 = arith.constant 0 : index
    %16 = vector.load %arg11[%c20, %c0_16] : memref<120x8xf32, #tpu.memory_space<vmem>>, vector<80x8xf32>
    %c32 = arith.constant 32 : index
    %c0_17 = arith.constant 0 : index
    %17 = vector.load %arg11[%c32, %c0_17] : memref<120x8xf32, #tpu.memory_space<vmem>>, vector<80x8xf32>
    %c34 = arith.constant 34 : index
    %c0_18 = arith.constant 0 : index
    %18 = vector.load %arg11[%c34, %c0_18] : memref<120x8xf32, #tpu.memory_space<vmem>>, vector<80x8xf32>
    %c36 = arith.constant 36 : index
    %c0_19 = arith.constant 0 : index
    %19 = vector.load %arg11[%c36, %c0_19] : memref<120x8xf32, #tpu.memory_space<vmem>>, vector<80x8xf32>
    %20 = tpu.concatenate %11, %12, %13, %14, %15, %16, %17, %18, %19 in 1 : vector<80x8xf32>, vector<80x8xf32>, vector<80x8xf32>, vector<80x8xf32>, vector<80x8xf32>, vector<80x8xf32>, vector<80x8xf32>, vector<80x8xf32>, vector<80x8xf32> -> vector<80x72xf32>
    %c0_20 = arith.constant 0 : index
    %c0_21 = arith.constant 0 : index
    %21 = vector.load %arg4[%c0_20, %c0_21] : memref<72x16xf32, #tpu.memory_space<vmem>>, vector<72x16xf32>
    %cst_22 = arith.constant dense<0.000000e+00> : vector<80x16xf32>
    %22 = tpu.matmul %20, %21, %cst_22 {dimension_numbers = #tpu.dot_dimension_numbers<[1], [0], [0], [1], [0, 0, 1, 1], [], []>} : vector<80x72xf32>, vector<72x16xf32>, vector<80x16xf32> -> vector<80x16xf32>
    %c0_23 = arith.constant 0 : index
    %c0_24 = arith.constant 0 : index
    %23 = vector.load %arg5[%c0_23, %c0_24] : memref<1x16xf32, #tpu.memory_space<vmem>>, vector<1x16xf32>
    %24 = vector.broadcast %23 : vector<1x16xf32> to vector<80x16xf32>
    %25 = arith.addf %22, %24 : vector<80x16xf32>
    %cst_25 = arith.constant 0.000000e+00 : f32
    %26 = vector.broadcast %cst_25 : f32 to vector<80x16xf32>
    %27 = arith.maximumf %25, %26 : vector<80x16xf32>
    %c0_26 = arith.constant 0 : index
    %c0_27 = arith.constant 0 : index
    %28 = vector.load %arg12[%c0_26, %c0_27] : memref<80x16xf32, #tpu.memory_space<vmem>>, vector<80x16xf32>
    tpu.vector_store %arg12[%c0_26, %c0_27], %27 {strides = array<i32>} : memref<80x16xf32, #tpu.memory_space<vmem>>, vector<80x16xf32>,
    %c0_28 = arith.constant 0 : index
    %c0_29 = arith.constant 0 : index
    %29 = vector.load %arg12[%c0_28, %c0_29] : memref<80x16xf32, #tpu.memory_space<vmem>>, vector<2x16xf32>
    %c2_30 = arith.constant 2 : index
    %c0_31 = arith.constant 0 : index
    %30 = vector.load %arg12[%c2_30, %c0_31] : memref<80x16xf32, #tpu.memory_space<vmem>>, vector<2x16xf32>
    %c4_32 = arith.constant 4 : index
    %c0_33 = arith.constant 0 : index
    %31 = vector.load %arg12[%c4_32, %c0_33] : memref<80x16xf32, #tpu.memory_space<vmem>>, vector<2x16xf32>
    %c6 = arith.constant 6 : index
    %c0_34 = arith.constant 0 : index
    %32 = vector.load %arg12[%c6, %c0_34] : memref<80x16xf32, #tpu.memory_space<vmem>>, vector<2x16xf32>
    %c8 = arith.constant 8 : index
    %c0_35 = arith.constant 0 : index
    %33 = vector.load %arg12[%c8, %c0_35] : memref<80x16xf32, #tpu.memory_space<vmem>>, vector<2x16xf32>
    %c16_36 = arith.constant 16 : index
    %c0_37 = arith.constant 0 : index
    %34 = vector.load %arg12[%c16_36, %c0_37] : memref<80x16xf32, #tpu.memory_space<vmem>>, vector<2x16xf32>
    %c18_38 = arith.constant 18 : index
    %c0_39 = arith.constant 0 : index
    %35 = vector.load %arg12[%c18_38, %c0_39] : memref<80x16xf32, #tpu.memory_space<vmem>>, vector<2x16xf32>
    %c20_40 = arith.constant 20 : index
    %c0_41 = arith.constant 0 : index
    %36 = vector.load %arg12[%c20_40, %c0_41] : memref<80x16xf32, #tpu.memory_space<vmem>>, vector<2x16xf32>
    %c22 = arith.constant 22 : index
    %c0_42 = arith.constant 0 : index
    %37 = vector.load %arg12[%c22, %c0_42] : memref<80x16xf32, #tpu.memory_space<vmem>>, vector<2x16xf32>
    %c24 = arith.constant 24 : index
    %c0_43 = arith.constant 0 : index
    %38 = vector.load %arg12[%c24, %c0_43] : memref<80x16xf32, #tpu.memory_space<vmem>>, vector<2x16xf32>
    %c32_44 = arith.constant 32 : index
    %c0_45 = arith.constant 0 : index
    %39 = vector.load %arg12[%c32_44, %c0_45] : memref<80x16xf32, #tpu.memory_space<vmem>>, vector<2x16xf32>
    %c34_46 = arith.constant 34 : index
    %c0_47 = arith.constant 0 : index
    %40 = vector.load %arg12[%c34_46, %c0_47] : memref<80x16xf32, #tpu.memory_space<vmem>>, vector<2x16xf32>
    %c36_48 = arith.constant 36 : index
    %c0_49 = arith.constant 0 : index
    %41 = vector.load %arg12[%c36_48, %c0_49] : memref<80x16xf32, #tpu.memory_space<vmem>>, vector<2x16xf32>
    %c38 = arith.constant 38 : index
    %c0_50 = arith.constant 0 : index
    %42 = vector.load %arg12[%c38, %c0_50] : memref<80x16xf32, #tpu.memory_space<vmem>>, vector<2x16xf32>
    %c40 = arith.constant 40 : index
    %c0_51 = arith.constant 0 : index
    %43 = vector.load %arg12[%c40, %c0_51] : memref<80x16xf32, #tpu.memory_space<vmem>>, vector<2x16xf32>
    %c48 = arith.constant 48 : index
    %c0_52 = arith.constant 0 : index
    %44 = vector.load %arg12[%c48, %c0_52] : memref<80x16xf32, #tpu.memory_space<vmem>>, vector<2x16xf32>
    %c50 = arith.constant 50 : index
    %c0_53 = arith.constant 0 : index
    %45 = vector.load %arg12[%c50, %c0_53] : memref<80x16xf32, #tpu.memory_space<vmem>>, vector<2x16xf32>
    %c52 = arith.constant 52 : index
    %c0_54 = arith.constant 0 : index
    %46 = vector.load %arg12[%c52, %c0_54] : memref<80x16xf32, #tpu.memory_space<vmem>>, vector<2x16xf32>
    %c54 = arith.constant 54 : index
    %c0_55 = arith.constant 0 : index
    %47 = vector.load %arg12[%c54, %c0_55] : memref<80x16xf32, #tpu.memory_space<vmem>>, vector<2x16xf32>
    %c56 = arith.constant 56 : index
    %c0_56 = arith.constant 0 : index
    %48 = vector.load %arg12[%c56, %c0_56] : memref<80x16xf32, #tpu.memory_space<vmem>>, vector<2x16xf32>
    %c64 = arith.constant 64 : index
    %c0_57 = arith.constant 0 : index
    %49 = vector.load %arg12[%c64, %c0_57] : memref<80x16xf32, #tpu.memory_space<vmem>>, vector<2x16xf32>
    %c66 = arith.constant 66 : index
    %c0_58 = arith.constant 0 : index
    %50 = vector.load %arg12[%c66, %c0_58] : memref<80x16xf32, #tpu.memory_space<vmem>>, vector<2x16xf32>
    %c68 = arith.constant 68 : index
    %c0_59 = arith.constant 0 : index
    %51 = vector.load %arg12[%c68, %c0_59] : memref<80x16xf32, #tpu.memory_space<vmem>>, vector<2x16xf32>
    %c70 = arith.constant 70 : index
    %c0_60 = arith.constant 0 : index
    %52 = vector.load %arg12[%c70, %c0_60] : memref<80x16xf32, #tpu.memory_space<vmem>>, vector<2x16xf32>
    %c72 = arith.constant 72 : index
    %c0_61 = arith.constant 0 : index
    %53 = vector.load %arg12[%c72, %c0_61] : memref<80x16xf32, #tpu.memory_space<vmem>>, vector<2x16xf32>
    %54 = tpu.concatenate %29, %30, %31, %32, %33, %34, %35, %36, %37, %38, %39, %40, %41, %42, %43, %44 in 1 : vector<2x16xf32>, vector<2x16xf32>, vector<2x16xf32>, vector<2x16xf32>, vector<2x16xf32>, vector<2x16xf32>, vector<2x16xf32>, vector<2x16xf32>, vector<2x16xf32>, vector<2x16xf32>, vector<2x16xf32>, vector<2x16xf32>, vector<2x16xf32>, vector<2x16xf32>, vector<2x16xf32>, vector<2x16xf32> -> vector<2x256xf32>
    %55 = tpu.concatenate %45, %46, %47, %48, %49, %50, %51, %52, %53 in 1 : vector<2x16xf32>, vector<2x16xf32>, vector<2x16xf32>, vector<2x16xf32>, vector<2x16xf32>, vector<2x16xf32>, vector<2x16xf32>, vector<2x16xf32>, vector<2x16xf32> -> vector<2x144xf32>
    %56 = tpu.concatenate %54, %55 in 1 : vector<2x256xf32>, vector<2x144xf32> -> vector<2x400xf32>
    %c0_62 = arith.constant 0 : index
    %c0_63 = arith.constant 0 : index
    %57 = vector.load %arg6[%c0_62, %c0_63] : memref<400x32xf32, #tpu.memory_space<vmem>>, vector<400x32xf32>
    %cst_64 = arith.constant dense<0.000000e+00> : vector<2x32xf32>
    %58 = tpu.matmul %56, %57, %cst_64 {dimension_numbers = #tpu.dot_dimension_numbers<[1], [0], [0], [1], [0, 0, 1, 1], [], []>} : vector<2x400xf32>, vector<400x32xf32>, vector<2x32xf32> -> vector<2x32xf32>
    %c0_65 = arith.constant 0 : index
    %c0_66 = arith.constant 0 : index
    %59 = vector.load %arg7[%c0_65, %c0_66] : memref<1x32xf32, #tpu.memory_space<vmem>>, vector<1x32xf32>
    %60 = vector.broadcast %59 : vector<1x32xf32> to vector<2x32xf32>
    %61 = arith.addf %58, %60 : vector<2x32xf32>
    %cst_67 = arith.constant 0.000000e+00 : f32
    %62 = vector.broadcast %cst_67 : f32 to vector<2x32xf32>
    %63 = arith.maximumf %61, %62 : vector<2x32xf32>
    %c0_68 = arith.constant 0 : index
    %c0_69 = arith.constant 0 : index
    %64 = vector.load %arg8[%c0_68, %c0_69] : memref<32x128xf32, #tpu.memory_space<vmem>>, vector<32x128xf32>
    %cst_70 = arith.constant dense<0.000000e+00> : vector<2x128xf32>
    %65 = tpu.matmul %63, %64, %cst_70 {dimension_numbers = #tpu.dot_dimension_numbers<[1], [0], [0], [1], [0, 0, 1, 1], [], []>} : vector<2x32xf32>, vector<32x128xf32>, vector<2x128xf32> -> vector<2x128xf32>
    %c0_71 = arith.constant 0 : index
    %c0_72 = arith.constant 0 : index
    %66 = vector.load %arg9[%c0_71, %c0_72] : memref<1x128xf32, #tpu.memory_space<vmem>>, vector<1x128xf32>
    %67 = vector.broadcast %66 : vector<1x128xf32> to vector<2x128xf32>
    %68 = arith.addf %65, %67 : vector<2x128xf32>
    %c0_73 = arith.constant 0 : index
    %c0_74 = arith.constant 0 : index
    %69 = vector.load %arg10[%c0_73, %c0_74] : memref<2x128xf32, #tpu.memory_space<vmem>>, vector<2x128xf32>
    tpu.vector_store %arg10[%c0_73, %c0_74], %68 {strides = array<i32>} : memref<2x128xf32, #tpu.memory_space<vmem>>, vector<2x128xf32>,
    return
  }
  func.func @transform_0(%arg0: i32) -> (i32, i32) {
    %c0_i32 = arith.constant 0 : i32
    %c0_i32_0 = arith.constant 0 : i32
    return %arg0, %c0_i32 : i32, i32
  }
  func.func @transform_1(%arg0: i32) -> (i32, i32) {
    %c0_i32 = arith.constant 0 : i32
    %c0_i32_0 = arith.constant 0 : i32
    %c0_i32_1 = arith.constant 0 : i32
    return %c0_i32, %c0_i32_0 : i32, i32
  }
  func.func @transform_2(%arg0: i32) -> (i32, i32) {
    %c0_i32 = arith.constant 0 : i32
    %c0_i32_0 = arith.constant 0 : i32
    %c0_i32_1 = arith.constant 0 : i32
    return %c0_i32, %c0_i32_0 : i32, i32
  }
  func.func @transform_3(%arg0: i32) -> (i32, i32) {
    %c0_i32 = arith.constant 0 : i32
    %c0_i32_0 = arith.constant 0 : i32
    %c0_i32_1 = arith.constant 0 : i32
    return %c0_i32, %c0_i32_0 : i32, i32
  }
  func.func @transform_4(%arg0: i32) -> (i32, i32) {
    %c0_i32 = arith.constant 0 : i32
    %c0_i32_0 = arith.constant 0 : i32
    %c0_i32_1 = arith.constant 0 : i32
    return %c0_i32, %c0_i32_0 : i32, i32
  }
  func.func @transform_5(%arg0: i32) -> (i32, i32) {
    %c0_i32 = arith.constant 0 : i32
    %c0_i32_0 = arith.constant 0 : i32
    %c0_i32_1 = arith.constant 0 : i32
    return %c0_i32, %c0_i32_0 : i32, i32
  }
  func.func @transform_6(%arg0: i32) -> (i32, i32) {
    %c0_i32 = arith.constant 0 : i32
    %c0_i32_0 = arith.constant 0 : i32
    %c0_i32_1 = arith.constant 0 : i32
    return %c0_i32, %c0_i32_0 : i32, i32
  }
  func.func @transform_7(%arg0: i32) -> (i32, i32) {
    %c0_i32 = arith.constant 0 : i32
    %c0_i32_0 = arith.constant 0 : i32
    %c0_i32_1 = arith.constant 0 : i32
    return %c0_i32, %c0_i32_0 : i32, i32
  }
  func.func @transform_8(%arg0: i32) -> (i32, i32) {
    %c0_i32 = arith.constant 0 : i32
    %c0_i32_0 = arith.constant 0 : i32
    %c0_i32_1 = arith.constant 0 : i32
    return %c0_i32, %c0_i32_0 : i32, i32
  }
  func.func @transform_9(%arg0: i32) -> (i32, i32) {
    %c0_i32 = arith.constant 0 : i32
    %c0_i32_0 = arith.constant 0 : i32
    return %arg0, %c0_i32 : i32, i32
  }
}

</mosaic_0001>

<llo_original>
// kernel: dqn_fused_forward.1
$region0: #{dqn_fused_forward.1}
  #allocation0 [shape = 'u32[]', space=smem, size = 0x4, offset = 0x4, fixed_abs, tag = 'smem constant byte address 0x4 - core index']
  #allocation1 [shape = 'u32[144,128]{1,0:T(1,128)}', space=vmem, size = 0x12000, scoped, tag = 'internal scratch']
  #allocation2 [shape = 'f32[120,8]{1,0:T(8,128)}', space=vmem, size = 0xf000, scoped, tag = 'scratch operand']
  #allocation3 [shape = 'f32[80,16]{1,0:T(8,128)}', space=vmem, size = 0xa000, scoped, tag = 'scratch operand']
  %s0 = inlined_call_operand.vmem [shape: f32[112,64], index: 0, kind: input, shape index: {}]
  %s1 = inlined_call_operand.vmem [shape: f32[64,8], index: 1, kind: input, shape index: {}]
  %s2 = inlined_call_operand.vmem [shape: f32[1,8], index: 2, kind: input, shape index: {}]
  %s3 = inlined_call_operand.vmem [shape: f32[72,16], index: 3, kind: input, shape index: {}]
  %s4 = inlined_call_operand.vmem [shape: f32[1,16], index: 4, kind: input, shape index: {}]
  %s5 = inlined_call_operand.vmem [shape: f32[400,32], index: 5, kind: input, shape index: {}]
  %s6 = inlined_call_operand.vmem [shape: f32[1,32], index: 6, kind: input, shape index: {}]
  %s7 = inlined_call_operand.vmem [shape: f32[32,128], index: 7, kind: input, shape index: {}]
  %s8 = inlined_call_operand.vmem [shape: f32[1,128], index: 8, kind: input, shape index: {}]
  %s9 = inlined_call_operand.hbm [shape: f32[2,128], index: 9, kind: output, shape index: {}]
  %s10 = sld [smem:[#allocation0]]
  $region46: #{dqn_fused_forward.1} parent=0
    _
  %s12 = ssub.s32 1, %s10
  %s13 = scalar_select 0, %s12, %s10
  $region1: #{dqn_fused_forward.1} parent=0
    #allocation4 [shape = 'u8[1024]{0}', space=vmem, size = 0x400, scoped, tag = 'output window, operand 0, single buffered']
    #allocation5 [shape = 's32[1]{0}', space=sflag, size = 0x4, scoped, tag = 'scoped memory for dqn_fused_forward.1']
    %14 = vsyncpa [#allocation5], 0
    // Predicated region
    $region2: #{dqn_fused_forward.1} parent=1 // pred_check
      _
    $region3: #{dqn_fused_forward.1} parent=1 // pred_check_branch
      %16 = sbr.rel (0) target = $region5
    $region4: #{dqn_fused_forward.1} parent=1 // pred_region
      _
    $region5: #{dqn_fused_forward.1} parent=1 // pred_fallthru
      _
    // Predicated region
    $region6: #{dqn_fused_forward.1} parent=1 // pred_check
      _
    $region7: #{dqn_fused_forward.1} parent=1 // pred_check_branch
      %18 = sbr.rel (0) target = $region9
    $region8: #{dqn_fused_forward.1} parent=1 // pred_region
      _
    $region9: #{dqn_fused_forward.1} parent=1 // pred_fallthru
      _
    // Predicated region
    $region10: #{dqn_fused_forward.1} parent=1 // pred_check
      _
    $region11: #{dqn_fused_forward.1} parent=1 // pred_check_branch
      %20 = sbr.rel (0) target = $region13
    $region12: #{dqn_fused_forward.1} parent=1 // pred_region
      _
    $region13: #{dqn_fused_forward.1} parent=1 // pred_fallthru
      _
    // Predicated region
    $region14: #{dqn_fused_forward.1} parent=1 // pred_check
      _
    $region15: #{dqn_fused_forward.1} parent=1 // pred_check_branch
      %22 = sbr.rel (0) target = $region17
    $region16: #{dqn_fused_forward.1} parent=1 // pred_region
      _
    $region17: #{dqn_fused_forward.1} parent=1 // pred_fallthru
      _
    // Predicated region
    $region18: #{dqn_fused_forward.1} parent=1 // pred_check
      _
    $region19: #{dqn_fused_forward.1} parent=1 // pred_check_branch
      %24 = sbr.rel (0) target = $region21
    $region20: #{dqn_fused_forward.1} parent=1 // pred_region
      _
    $region21: #{dqn_fused_forward.1} parent=1 // pred_fallthru
      _
    // Predicated region
    $region22: #{dqn_fused_forward.1} parent=1 // pred_check
      _
    $region23: #{dqn_fused_forward.1} parent=1 // pred_check_branch
      %26 = sbr.rel (0) target = $region25
    $region24: #{dqn_fused_forward.1} parent=1 // pred_region
      _
    $region25: #{dqn_fused_forward.1} parent=1 // pred_fallthru
      _
    // Predicated region
    $region26: #{dqn_fused_forward.1} parent=1 // pred_check
      _
    $region27: #{dqn_fused_forward.1} parent=1 // pred_check_branch
      %28 = sbr.rel (0) target = $region29
    $region28: #{dqn_fused_forward.1} parent=1 // pred_region
      _
    $region29: #{dqn_fused_forward.1} parent=1 // pred_fallthru
      _
    // Predicated region
    $region30: #{dqn_fused_forward.1} parent=1 // pred_check
      _
    $region31: #{dqn_fused_forward.1} parent=1 // pred_check_branch
      %30 = sbr.rel (0) target = $region33
    $region32: #{dqn_fused_forward.1} parent=1 // pred_region
      _
    $region33: #{dqn_fused_forward.1} parent=1 // pred_fallthru
      _
    // Predicated region
    $region34: #{dqn_fused_forward.1} parent=1 // pred_check
      _
    $region35: #{dqn_fused_forward.1} parent=1 // pred_check_branch
      %32 = sbr.rel (0) target = $region37
    $region36: #{dqn_fused_forward.1} parent=1 // pred_region
      _
    $region37: #{dqn_fused_forward.1} parent=1 // pred_fallthru
      _
    %v33 = vld [vmem:[%s0] sm:$0xff]
    %v34 = vld [vmem:[%s0 + $0x8] sm:$0xff]
    %v35 = vld [vmem:[%s0 + $0x10] sm:$0xff]
    %v36 = vld [vmem:[%s0 + $0x18] sm:$0xff]
    %v37 = vld [vmem:[%s0 + $0x20] sm:$0xff]
    %v38 = vld [vmem:[%s0 + $0x28] sm:$0xff]
    %v39 = vld [vmem:[%s0 + $0x30] sm:$0xff]
    %v40 = vld [vmem:[%s0 + $0x38] sm:$0xff]
    %v41 = vld [vmem:[%s0 + $0x40] sm:$0xff]
    %v42 = vld [vmem:[%s0 + $0x48] sm:$0xff]
    %v43 = vld [vmem:[%s0 + $0x50] sm:$0xff]
    %v44 = vld [vmem:[%s0 + $0x58] sm:$0xff]
    %v45 = vld [vmem:[%s0 + $0x60] sm:$0xff]
    %v46 = vld [vmem:[%s0 + $0x68] sm:$0xff]
    %v47 = vld [vmem:[%s1] sm:$0xff]
    %v48 = vld [vmem:[%s1 + $0x8] sm:$0xff]
    %v49 = vld [vmem:[%s1 + $0x10] sm:$0xff]
    %v50 = vld [vmem:[%s1 + $0x18] sm:$0xff]
    %v51 = vld [vmem:[%s1 + $0x20] sm:$0xff]
    %v52 = vld [vmem:[%s1 + $0x28] sm:$0xff]
    %v53 = vld [vmem:[%s1 + $0x30] sm:$0xff]
    %v54 = vld [vmem:[%s1 + $0x38] sm:$0xff]
    %v55 = vld [vmem:[%s2] sm:$0x1]
    %v57 = vlaneseq
    %v58 = vshrl.u32 %v57, 7
    %v59 = vsub.s32 0, %v58
    %v60 = vrot.slane %v55, %v59
    %vm62 = vcmask 523264
    %v64 = vsel %vm62, %v33, 0
    %v67 = vsel %vm62, %v34, 0
    %v70 = vsel %vm62, %v35, 0
    %v73 = vsel %vm62, %v36, 0
    %v76 = vsel %vm62, %v37, 0
    %v79 = vsel %vm62, %v38, 0
    %v82 = vsel %vm62, %v39, 0
    %v85 = vsel %vm62, %v40, 0
    %v88 = vsel %vm62, %v41, 0
    %v91 = vsel %vm62, %v42, 0
    %v94 = vsel %vm62, %v43, 0
    %v97 = vsel %vm62, %v44, 0
    %v100 = vsel %vm62, %v45, 0
    %v103 = vsel %vm62, %v46, 0
    %105 = vmatprep.subr.mxu0 0.0
    %106 = vmatpush1.msra.mxu0 %v47
    %107 = vmatprep.subr.mxu0 0.0
    %108 = vmatpush1.msra.mxu0 %v48
    %109 = vmatprep.subr.mxu0 0.0
    %110 = vmatpush1.msra.mxu0 %v49
    %111 = vmatprep.subr.mxu0 0.0
    %112 = vmatpush1.msra.mxu0 %v50
    %113 = vmatprep.subr.mxu0 0.0
    %114 = vmatpush1.msra.mxu0 %v51
    %115 = vmatprep.subr.mxu0 0.0
    %116 = vmatpush1.msra.mxu0 %v52
    %117 = vmatprep.subr.mxu0 0.0
    %118 = vmatpush1.msra.mxu0 %v53
    %119 = vmatprep.subr.mxu0 0.0
    %120 = vmatpush1.msra.mxu0 %v54
    %121 = vmatprep.subr.mxu0 0.0
    %122 = vmatpush1.msra.mxu0 0.0
    %123 = vmatprep.subr.mxu0 0.0
    %124 = vmatpush1.msra.mxu0 0.0
    %125 = vmatprep.subr.mxu0 0.0
    %126 = vmatpush1.msra.mxu0 0.0
    %127 = vmatprep.subr.mxu0 0.0
    %128 = vmatpush1.msra.mxu0 0.0
    %129 = vmatprep.subr.mxu0 0.0
    %130 = vmatpush1.msra.mxu0 0.0
    %131 = vmatprep.subr.mxu0 0.0
    %132 = vmatpush1.msra.mxu0 0.0
    %133 = vmatprep.subr.mxu0 0.0
    %134 = vmatpush1.msra.mxu0 0.0
    %135 = vmatprep.subr.mxu0 0.0
    %136 = vmatpush1.msra.mxu0 0.0
    %137 = vmatprep.subr.mxu0 0.0
    %138 = vmatpush1.msra.mxu0 0.0
    %139 = vmatprep.subr.mxu0 0.0
    %140 = vmatpush1.msra.mxu0 0.0
    %141 = vmatprep.subr.mxu0 0.0
    %142 = vmatpush1.msra.mxu0 0.0
    %143 = vmatprep.subr.mxu0 0.0
    %144 = vmatpush1.msra.mxu0 0.0
    %145 = vmatprep.subr.mxu0 0.0
    %146 = vmatpush1.msra.mxu0 0.0
    %147 = vmatprep.subr.mxu0 0.0
    %148 = vmatpush1.msra.mxu0 0.0
    %149 = vmatprep.subr.mxu0 0.0
    %150 = vmatpush1.msra.mxu0 0.0
    %151 = vmatprep.subr.mxu0 0.0
    %152 = vmatpush1.msra.mxu0 0.0
    %153 = vmatprep.subr.mxu0 0.0
    %154 = vmatpush1.msra.mxu0 0.0
    %155 = vmatprep.subr.mxu0 0.0
    %156 = vmatpush1.msra.mxu0 0.0
    %157 = vmatprep.subr.mxu0 0.0
    %158 = vmatpush1.msra.mxu0 0.0
    %159 = vmatprep.subr.mxu0 0.0
    %160 = vmatpush1.msra.mxu0 0.0
    %161 = vmatprep.subr.mxu0 0.0
    %162 = vmatpush1.msra.mxu0 0.0
    %163 = vmatprep.subr.mxu0 0.0
    %164 = vmatpush1.msra.mxu0 0.0
    %165 = vmatprep.subr.mxu0 0.0
    %166 = vmatpush1.msra.mxu0 0.0
    %167 = vmatprep.subr.mxu0 0.0
    %168 = vmatpush1.msra.mxu0 0.0
    %169 = vmatprep.mubr.f32.mxu0 0.0
    %170 = vmatmul.mubr.f32.gmra.mrb[0].mxu0 %v64
    %v171 = vpop.f32.mrb[0].mxu0
    %v172 = vadd.f32 %v60, %v171
    %v173 = vpop.f32.mrb[0].mxu0
    %174 = vmatprep.mubr.f32.mxu0 0.0
    %175 = vmatmul.mubr.f32.gmra.mrb[0].mxu0 %v67
    %v176 = vpop.f32.mrb[0].mxu0
    %v177 = vadd.f32 %v60, %v176
    %v178 = vpop.f32.mrb[0].mxu0
    %179 = vmatprep.mubr.f32.mxu0 0.0
    %180 = vmatmul.mubr.f32.gmra.mrb[0].mxu0 %v70
    %v181 = vpop.f32.mrb[0].mxu0
    %v182 = vadd.f32 %v60, %v181
    %v183 = vpop.f32.mrb[0].mxu0
    %184 = vmatprep.mubr.f32.mxu0 0.0
    %185 = vmatmul.mubr.f32.gmra.mrb[0].mxu0 %v73
    %v186 = vpop.f32.mrb[0].mxu0
    %v187 = vadd.f32 %v60, %v186
    %v188 = vpop.f32.mrb[0].mxu0
    %189 = vmatprep.mubr.f32.mxu0 0.0
    %190 = vmatmul.mubr.f32.gmra.mrb[0].mxu0 %v76
    %v191 = vpop.f32.mrb[0].mxu0
    %v192 = vadd.f32 %v60, %v191
    %v193 = vpop.f32.mrb[0].mxu0
    %194 = vmatprep.mubr.f32.mxu0 0.0
    %195 = vmatmul.mubr.f32.gmra.mrb[0].mxu0 %v79
    %v196 = vpop.f32.mrb[0].mxu0
    %v197 = vadd.f32 %v60, %v196
    %v198 = vpop.f32.mrb[0].mxu0
    %199 = vmatprep.mubr.f32.mxu0 0.0
    %200 = vmatmul.mubr.f32.gmra.mrb[0].mxu0 %v82
    %v201 = vpop.f32.mrb[0].mxu0
    %v202 = vadd.f32 %v60, %v201
    %v203 = vpop.f32.mrb[0].mxu0
    %204 = vmatprep.mubr.f32.mxu0 0.0
    %205 = vmatmul.mubr.f32.gmra.mrb[0].mxu0 %v85
    %v206 = vpop.f32.mrb[0].mxu0
    %v207 = vadd.f32 %v60, %v206
    %v208 = vpop.f32.mrb[0].mxu0
    %209 = vmatprep.mubr.f32.mxu0 0.0
    %210 = vmatmul.mubr.f32.gmra.mrb[0].mxu0 %v88
    %v211 = vpop.f32.mrb[0].mxu0
    %v212 = vadd.f32 %v60, %v211
    %v213 = vpop.f32.mrb[0].mxu0
    %214 = vmatprep.mubr.f32.mxu0 0.0
    %215 = vmatmul.mubr.f32.gmra.mrb[0].mxu0 %v91
    %v216 = vpop.f32.mrb[0].mxu0
    %v217 = vadd.f32 %v60, %v216
    %v218 = vpop.f32.mrb[0].mxu0
    %219 = vmatprep.mubr.f32.mxu0 0.0
    %220 = vmatmul.mubr.f32.gmra.mrb[0].mxu0 %v94
    %v221 = vpop.f32.mrb[0].mxu0
    %v222 = vadd.f32 %v60, %v221
    %v223 = vpop.f32.mrb[0].mxu0
    %224 = vmatprep.mubr.f32.mxu0 0.0
    %225 = vmatmul.mubr.f32.gmra.mrb[0].mxu0 %v97
    %v226 = vpop.f32.mrb[0].mxu0
    %v227 = vadd.f32 %v60, %v226
    %v228 = vpop.f32.mrb[0].mxu0
    %229 = vmatprep.mubr.f32.mxu0 0.0
    %230 = vmatmul.mubr.f32.gmra.mrb[0].mxu0 %v100
    %v231 = vpop.f32.mrb[0].mxu0
    %v232 = vadd.f32 %v60, %v231
    %v233 = vpop.f32.mrb[0].mxu0
    %234 = vmatprep.mubr.f32.mxu0 0.0
    %235 = vmatmul.mubr.f32.gmra.mrb[0].mxu0 %v103
    %v236 = vpop.f32.mrb[0].mxu0
    %v237 = vadd.f32 %v60, %v236
    %v238 = vpop.f32.mrb[0].mxu0
    %239 = vdwg.mxu0
    %v240 = vmax.f32 %v172, 0.0
    %v241 = vmax.f32 %v177, 0.0
    %v242 = vmax.f32 %v182, 0.0
    %v243 = vmax.f32 %v187, 0.0
    %v244 = vmax.f32 %v192, 0.0
    %v245 = vmax.f32 %v197, 0.0
    %v246 = vmax.f32 %v202, 0.0
    %v247 = vmax.f32 %v207, 0.0
    %v248 = vmax.f32 %v212, 0.0
    %v249 = vmax.f32 %v217, 0.0
    %v250 = vmax.f32 %v222, 0.0
    %v251 = vmax.f32 %v227, 0.0
    %v252 = vmax.f32 %v232, 0.0
    %v253 = vmax.f32 %v237, 0.0
    %vm254 = vcmask 64512
    %255 = vst.msk [vmem:[#allocation2] sm:$0xff] %vm254, %v240
    %256 = vst.msk [vmem:[#allocation2 + $0x8] sm:$0xff] %vm254, %v241
    %257 = vst.msk [vmem:[#allocation2 + $0x10] sm:$0xff] %vm254, %v242
    %258 = vst.msk [vmem:[#allocation2 + $0x18] sm:$0xff] %vm254, %v243
    %259 = vst.msk [vmem:[#allocation2 + $0x20] sm:$0xff] %vm254, %v244
    %260 = vst.msk [vmem:[#allocation2 + $0x28] sm:$0xff] %vm254, %v245
    %261 = vst.msk [vmem:[#allocation2 + $0x30] sm:$0xff] %vm254, %v246
    %262 = vst.msk [vmem:[#allocation2 + $0x38] sm:$0xff] %vm254, %v247
    %263 = vst.msk [vmem:[#allocation2 + $0x40] sm:$0xff] %vm254, %v248
    %264 = vst.msk [vmem:[#allocation2 + $0x48] sm:$0xff] %vm254, %v249
    %265 = vst.msk [vmem:[#allocation2 + $0x50] sm:$0xff] %vm254, %v250
    %266 = vst.msk [vmem:[#allocation2 + $0x58] sm:$0xff] %vm254, %v251
    %267 = vst.msk [vmem:[#allocation2 + $0x60] sm:$0xff] %vm254, %v252
    %268 = vst.msk [vmem:[#allocation2 + $0x68] sm:$0xff] %vm254, %v253
    %269 = vst.msk [vmem:[#allocation2 + $0x70] sm:$0xff] %vm254, 0.0
    %v270 = vld [vmem:[#allocation2] sm:$0xff]
    %v271 = vld [vmem:[#allocation2 + $0x8] sm:$0xff]
    %v272 = vld [vmem:[#allocation2 + $0x10] sm:$0xff]
    %v273 = vld [vmem:[#allocation2 + $0x18] sm:$0xff]
    %v274 = vld [vmem:[#allocation2 + $0x20] sm:$0xff]
    %v275 = vld [vmem:[#allocation2 + $0x28] sm:$0xff]
    %v276 = vld [vmem:[#allocation2 + $0x30] sm:$0xff]
    %v277 = vld [vmem:[#allocation2 + $0x38] sm:$0xff]
    %v278 = vld [vmem:[#allocation2 + $0x40] sm:$0xff]
    %v279 = vld [vmem:[#allocation2 + $0x48] sm:$0xff]
    %v280 = vld [vmem:[#allocation2 + $0x2] sm:$0xff]
    %v281 = vld [vmem:[#allocation2 + $0xa] sm:$0xff]
    %v282 = vld [vmem:[#allocation2 + $0x12] sm:$0xff]
    %v283 = vld [vmem:[#allocation2 + $0x1a] sm:$0xff]
    %v284 = vld [vmem:[#allocation2 + $0x22] sm:$0xff]
    %v285 = vld [vmem:[#allocation2 + $0x2a] sm:$0xff]
    %v286 = vld [vmem:[#allocation2 + $0x32] sm:$0xff]
    %v287 = vld [vmem:[#allocation2 + $0x3a] sm:$0xff]
    %v288 = vld [vmem:[#allocation2 + $0x42] sm:$0xff]
    %v289 = vld [vmem:[#allocation2 + $0x4a] sm:$0xff]
    %v290 = vld [vmem:[#allocation2 + $0x4] sm:$0xff]
    %v291 = vld [vmem:[#allocation2 + $0xc] sm:$0xff]
    %v292 = vld [vmem:[#allocation2 + $0x14] sm:$0xff]
    %v293 = vld [vmem:[#allocation2 + $0x1c] sm:$0xff]
    %v294 = vld [vmem:[#allocation2 + $0x24] sm:$0xff]
    %v295 = vld [vmem:[#allocation2 + $0x2c] sm:$0xff]
    %v296 = vld [vmem:[#allocation2 + $0x34] sm:$0xff]
    %v297 = vld [vmem:[#allocation2 + $0x3c] sm:$0xff]
    %v298 = vld [vmem:[#allocation2 + $0x44] sm:$0xff]
    %v299 = vld [vmem:[#allocation2 + $0x4c] sm:$0xff]
    %v300 = vld [vmem:[#allocation2 + $0x50] sm:$0xff]
    %v301 = vld [vmem:[#allocation2 + $0x58] sm:$0xff]
    %v302 = vld [vmem:[#allocation2 + $0x52] sm:$0xff]
    %v303 = vld [vmem:[#allocation2 + $0x5a] sm:$0xff]
    %v304 = vld [vmem:[#allocation2 + $0x54] sm:$0xff]
    %v305 = vld [vmem:[#allocation2 + $0x5c] sm:$0xff]
    %v306 = vld [vmem:[#allocation2 + $0x60] sm:$0xff]
    %v307 = vld [vmem:[#allocation2 + $0x68] sm:$0xff]
    %v308 = vld [vmem:[#allocation2 + $0x62] sm:$0xff]
    %v309 = vld [vmem:[#allocation2 + $0x6a] sm:$0xff]
    %v310 = vld [vmem:[#allocation2 + $0x64] sm:$0xff]
    %v311 = vld [vmem:[#allocation2 + $0x6c] sm:$0xff]
    %322 = vrot.lane.b32.xlu0 %v280, 8
    %v323 = vpop.permute.xlu0 %322
    %324 = vrot.lane.b32.xlu0 %v281, 8
    %v325 = vpop.permute.xlu0 %324
    %326 = vrot.lane.b32.xlu0 %v282, 8
    %v327 = vpop.permute.xlu0 %326
    %328 = vrot.lane.b32.xlu0 %v283, 8
    %v329 = vpop.permute.xlu0 %328
    %330 = vrot.lane.b32.xlu0 %v284, 8
    %v331 = vpop.permute.xlu0 %330
    %332 = vrot.lane.b32.xlu0 %v285, 8
    %v333 = vpop.permute.xlu0 %332
    %334 = vrot.lane.b32.xlu0 %v286, 8
    %v335 = vpop.permute.xlu0 %334
    %336 = vrot.lane.b32.xlu0 %v287, 8
    %v337 = vpop.permute.xlu0 %336
    %338 = vrot.lane.b32.xlu0 %v288, 8
    %v339 = vpop.permute.xlu0 %338
    %340 = vrot.lane.b32.xlu0 %v289, 8
    %v341 = vpop.permute.xlu0 %340
    %362 = vrot.lane.b32.xlu0 %v290, 16
    %v363 = vpop.permute.xlu0 %362
    %364 = vrot.lane.b32.xlu0 %v291, 16
    %v365 = vpop.permute.xlu0 %364
    %366 = vrot.lane.b32.xlu0 %v292, 16
    %v367 = vpop.permute.xlu0 %366
    %368 = vrot.lane.b32.xlu0 %v293, 16
    %v369 = vpop.permute.xlu0 %368
    %370 = vrot.lane.b32.xlu0 %v294, 16
    %v371 = vpop.permute.xlu0 %370
    %372 = vrot.lane.b32.xlu0 %v295, 16
    %v373 = vpop.permute.xlu0 %372
    %374 = vrot.lane.b32.xlu0 %v296, 16
    %v375 = vpop.permute.xlu0 %374
    %376 = vrot.lane.b32.xlu0 %v297, 16
    %v377 = vpop.permute.xlu0 %376
    %378 = vrot.lane.b32.xlu0 %v298, 16
    %v379 = vpop.permute.xlu0 %378
    %380 = vrot.lane.b32.xlu0 %v299, 16
    %v381 = vpop.permute.xlu0 %380
    %402 = vrot.lane.b32.xlu0 %v272, 24
    %v403 = vpop.permute.xlu0 %402
    %404 = vrot.lane.b32.xlu0 %v273, 24
    %v405 = vpop.permute.xlu0 %404
    %406 = vrot.lane.b32.xlu0 %v274, 24
    %v407 = vpop.permute.xlu0 %406
    %408 = vrot.lane.b32.xlu0 %v275, 24
    %v409 = vpop.permute.xlu0 %408
    %410 = vrot.lane.b32.xlu0 %v276, 24
    %v411 = vpop.permute.xlu0 %410
    %412 = vrot.lane.b32.xlu0 %v277, 24
    %v413 = vpop.permute.xlu0 %412
    %414 = vrot.lane.b32.xlu0 %v278, 24
    %v415 = vpop.permute.xlu0 %414
    %416 = vrot.lane.b32.xlu0 %v279, 24
    %v417 = vpop.permute.xlu0 %416
    %418 = vrot.lane.b32.xlu0 %v300, 24
    %v419 = vpop.permute.xlu0 %418
    %420 = vrot.lane.b32.xlu0 %v301, 24
    %v421 = vpop.permute.xlu0 %420
    %434 = vrot.lane.b32.xlu0 %v282, 32
    %v435 = vpop.permute.xlu0 %434
    %436 = vrot.lane.b32.xlu0 %v283, 32
    %v437 = vpop.permute.xlu0 %436
    %438 = vrot.lane.b32.xlu0 %v284, 32
    %v439 = vpop.permute.xlu0 %438
    %440 = vrot.lane.b32.xlu0 %v285, 32
    %v441 = vpop.permute.xlu0 %440
    %442 = vrot.lane.b32.xlu0 %v286, 32
    %v443 = vpop.permute.xlu0 %442
    %444 = vrot.lane.b32.xlu0 %v287, 32
    %v445 = vpop.permute.xlu0 %444
    %446 = vrot.lane.b32.xlu0 %v288, 32
    %v447 = vpop.permute.xlu0 %446
    %448 = vrot.lane.b32.xlu0 %v289, 32
    %v449 = vpop.permute.xlu0 %448
    %450 = vrot.lane.b32.xlu0 %v302, 32
    %v451 = vpop.permute.xlu0 %450
    %452 = vrot.lane.b32.xlu0 %v303, 32
    %v453 = vpop.permute.xlu0 %452
    %466 = vrot.lane.b32.xlu0 %v292, 40
    %v467 = vpop.permute.xlu0 %466
    %468 = vrot.lane.b32.xlu0 %v293, 40
    %v469 = vpop.permute.xlu0 %468
    %470 = vrot.lane.b32.xlu0 %v294, 40
    %v471 = vpop.permute.xlu0 %470
    %472 = vrot.lane.b32.xlu0 %v295, 40
    %v473 = vpop.permute.xlu0 %472
    %474 = vrot.lane.b32.xlu0 %v296, 40
    %v475 = vpop.permute.xlu0 %474
    %476 = vrot.lane.b32.xlu0 %v297, 40
    %v477 = vpop.permute.xlu0 %476
    %478 = vrot.lane.b32.xlu0 %v298, 40
    %v479 = vpop.permute.xlu0 %478
    %480 = vrot.lane.b32.xlu0 %v299, 40
    %v481 = vpop.permute.xlu0 %480
    %482 = vrot.lane.b32.xlu0 %v304, 40
    %v483 = vpop.permute.xlu0 %482
    %484 = vrot.lane.b32.xlu0 %v305, 40
    %v485 = vpop.permute.xlu0 %484
    %498 = vrot.lane.b32.xlu0 %v274, 48
    %v499 = vpop.permute.xlu0 %498
    %500 = vrot.lane.b32.xlu0 %v275, 48
    %v501 = vpop.permute.xlu0 %500
    %502 = vrot.lane.b32.xlu0 %v276, 48
    %v503 = vpop.permute.xlu0 %502
    %504 = vrot.lane.b32.xlu0 %v277, 48
    %v505 = vpop.permute.xlu0 %504
    %506 = vrot.lane.b32.xlu0 %v278, 48
    %v507 = vpop.permute.xlu0 %506
    %508 = vrot.lane.b32.xlu0 %v279, 48
    %v509 = vpop.permute.xlu0 %508
    %510 = vrot.lane.b32.xlu0 %v300, 48
    %v511 = vpop.permute.xlu0 %510
    %512 = vrot.lane.b32.xlu0 %v301, 48
    %v513 = vpop.permute.xlu0 %512
    %514 = vrot.lane.b32.xlu0 %v306, 48
    %v515 = vpop.permute.xlu0 %514
    %516 = vrot.lane.b32.xlu0 %v307, 48
    %v517 = vpop.permute.xlu0 %516
    %530 = vrot.lane.b32.xlu0 %v284, 56
    %v531 = vpop.permute.xlu0 %530
    %532 = vrot.lane.b32.xlu0 %v285, 56
    %v533 = vpop.permute.xlu0 %532
    %534 = vrot.lane.b32.xlu0 %v286, 56
    %v535 = vpop.permute.xlu0 %534
    %536 = vrot.lane.b32.xlu0 %v287, 56
    %v537 = vpop.permute.xlu0 %536
    %538 = vrot.lane.b32.xlu0 %v288, 56
    %v539 = vpop.permute.xlu0 %538
    %540 = vrot.lane.b32.xlu0 %v289, 56
    %v541 = vpop.permute.xlu0 %540
    %542 = vrot.lane.b32.xlu0 %v302, 56
    %v543 = vpop.permute.xlu0 %542
    %544 = vrot.lane.b32.xlu0 %v303, 56
    %v545 = vpop.permute.xlu0 %544
    %546 = vrot.lane.b32.xlu0 %v308, 56
    %v547 = vpop.permute.xlu0 %546
    %548 = vrot.lane.b32.xlu0 %v309, 56
    %v549 = vpop.permute.xlu0 %548
    %562 = vrot.lane.b32.xlu0 %v294, 64
    %v563 = vpop.permute.xlu0 %562
    %564 = vrot.lane.b32.xlu0 %v295, 64
    %v565 = vpop.permute.xlu0 %564
    %566 = vrot.lane.b32.xlu0 %v296, 64
    %v567 = vpop.permute.xlu0 %566
    %568 = vrot.lane.b32.xlu0 %v297, 64
    %v569 = vpop.permute.xlu0 %568
    %570 = vrot.lane.b32.xlu0 %v298, 64
    %v571 = vpop.permute.xlu0 %570
    %572 = vrot.lane.b32.xlu0 %v299, 64
    %v573 = vpop.permute.xlu0 %572
    %574 = vrot.lane.b32.xlu0 %v304, 64
    %v575 = vpop.permute.xlu0 %574
    %576 = vrot.lane.b32.xlu0 %v305, 64
    %v577 = vpop.permute.xlu0 %576
    %578 = vrot.lane.b32.xlu0 %v310, 64
    %v579 = vpop.permute.xlu0 %578
    %580 = vrot.lane.b32.xlu0 %v311, 64
    %v581 = vpop.permute.xlu0 %580
    %v592 = vsel %vm254, %v270, %v323
    %v593 = vsel %vm254, %v271, %v325
    %v594 = vsel %vm254, %v272, %v327
    %v595 = vsel %vm254, %v273, %v329
    %v596 = vsel %vm254, %v274, %v331
    %v597 = vsel %vm254, %v275, %v333
    %v598 = vsel %vm254, %v276, %v335
    %v599 = vsel %vm254, %v277, %v337
    %v600 = vsel %vm254, %v278, %v339
    %v601 = vsel %vm254, %v279, %v341
    %vm602 = vcmask 130048
    %v603 = vsel %vm602, %v592, %v363
    %v604 = vsel %vm602, %v593, %v365
    %v605 = vsel %vm602, %v594, %v367
    %v606 = vsel %vm602, %v595, %v369
    %v607 = vsel %vm602, %v596, %v371
    %v608 = vsel %vm602, %v597, %v373
    %v609 = vsel %vm602, %v598, %v375
    %v610 = vsel %vm602, %v599, %v377
    %v611 = vsel %vm602, %v600, %v379
    %v612 = vsel %vm602, %v601, %v381
    %vm613 = vcmask 195584
    %v614 = vsel %vm613, %v603, %v403
    %v615 = vsel %vm613, %v604, %v405
    %v616 = vsel %vm613, %v605, %v407
    %v617 = vsel %vm613, %v606, %v409
    %v618 = vsel %vm613, %v607, %v411
    %v619 = vsel %vm613, %v608, %v413
    %v620 = vsel %vm613, %v609, %v415
    %v621 = vsel %vm613, %v610, %v417
    %v622 = vsel %vm613, %v611, %v419
    %v623 = vsel %vm613, %v612, %v421
    %vm624 = vcmask 261120
    %v625 = vsel %vm624, %v614, %v435
    %v626 = vsel %vm624, %v615, %v437
    %v627 = vsel %vm624, %v616, %v439
    %v628 = vsel %vm624, %v617, %v441
    %v629 = vsel %vm624, %v618, %v443
    %v630 = vsel %vm624, %v619, %v445
    %v631 = vsel %vm624, %v620, %v447
    %v632 = vsel %vm624, %v621, %v449
    %v633 = vsel %vm624, %v622, %v451
    %v634 = vsel %vm624, %v623, %v453
    %vm635 = vcmask 326656
    %v636 = vsel %vm635, %v625, %v467
    %v637 = vsel %vm635, %v626, %v469
    %v638 = vsel %vm635, %v627, %v471
    %v639 = vsel %vm635, %v628, %v473
    %v640 = vsel %vm635, %v629, %v475
    %v641 = vsel %vm635, %v630, %v477
    %v642 = vsel %vm635, %v631, %v479
    %v643 = vsel %vm635, %v632, %v481
    %v644 = vsel %vm635, %v633, %v483
    %v645 = vsel %vm635, %v634, %v485
    %vm646 = vcmask 392192
    %v647 = vsel %vm646, %v636, %v499
    %v648 = vsel %vm646, %v637, %v501
    %v649 = vsel %vm646, %v638, %v503
    %v650 = vsel %vm646, %v639, %v505
    %v651 = vsel %vm646, %v640, %v507
    %v652 = vsel %vm646, %v641, %v509
    %v653 = vsel %vm646, %v642, %v511
    %v654 = vsel %vm646, %v643, %v513
    %v655 = vsel %vm646, %v644, %v515
    %v656 = vsel %vm646, %v645, %v517
    %vm657 = vcmask 457728
    %v658 = vsel %vm657, %v647, %v531
    %v659 = vsel %vm657, %v648, %v533
    %v660 = vsel %vm657, %v649, %v535
    %v661 = vsel %vm657, %v650, %v537
    %v662 = vsel %vm657, %v651, %v539
    %v663 = vsel %vm657, %v652, %v541
    %v664 = vsel %vm657, %v653, %v543
    %v665 = vsel %vm657, %v654, %v545
    %v666 = vsel %vm657, %v655, %v547
    %v667 = vsel %vm657, %v656, %v549
    %v668 = vsel %vm62, %v658, %v563
    %v669 = vsel %vm62, %v659, %v565
    %v670 = vsel %vm62, %v660, %v567
    %v671 = vsel %vm62, %v661, %v569
    %v672 = vsel %vm62, %v662, %v571
    %v673 = vsel %vm62, %v663, %v573
    %v674 = vsel %vm62, %v664, %v575
    %v675 = vsel %vm62, %v665, %v577
    %v676 = vsel %vm62, %v666, %v579
    %v677 = vsel %vm62, %v667, %v581
    %v678 = vld [vmem:[%s3] sm:$0xff]
    %v679 = vld [vmem:[%s3 + $0x8] sm:$0xff]
    %v680 = vld [vmem:[%s3 + $0x10] sm:$0xff]
    %v681 = vld [vmem:[%s3 + $0x18] sm:$0xff]
    %v682 = vld [vmem:[%s3 + $0x20] sm:$0xff]
    %v683 = vld [vmem:[%s3 + $0x28] sm:$0xff]
    %v684 = vld [vmem:[%s3 + $0x30] sm:$0xff]
    %v685 = vld [vmem:[%s3 + $0x38] sm:$0xff]
    %v686 = vld [vmem:[%s3 + $0x40] sm:$0xff]
    %v687 = vld [vmem:[%s4] sm:$0x1]
    %v689 = vlaneseq
    %v690 = vshrl.u32 %v689, 7
    %v691 = vsub.s32 0, %v690
    %v692 = vrot.slane %v687, %v691
    %vm694 = vcmask 588800
    %v696 = vsel %vm694, %v668, 0
    %v699 = vsel %vm694, %v669, 0
    %v702 = vsel %vm694, %v670, 0
    %v705 = vsel %vm694, %v671, 0
    %v708 = vsel %vm694, %v672, 0
    %v711 = vsel %vm694, %v673, 0
    %v714 = vsel %vm694, %v674, 0
    %v717 = vsel %vm694, %v675, 0
    %v720 = vsel %vm694, %v676, 0
    %v723 = vsel %vm694, %v677, 0
    %725 = vmatprep.subr.mxu0 0.0
    %726 = vmatpush1.msra.mxu0 %v678
    %727 = vmatprep.subr.mxu0 0.0
    %728 = vmatpush1.msra.mxu0 %v679
    %729 = vmatprep.subr.mxu0 0.0
    %730 = vmatpush1.msra.mxu0 %v680
    %731 = vmatprep.subr.mxu0 0.0
    %732 = vmatpush1.msra.mxu0 %v681
    %733 = vmatprep.subr.mxu0 0.0
    %734 = vmatpush1.msra.mxu0 %v682
    %735 = vmatprep.subr.mxu0 0.0
    %736 = vmatpush1.msra.mxu0 %v683
    %737 = vmatprep.subr.mxu0 0.0
    %738 = vmatpush1.msra.mxu0 %v684
    %739 = vmatprep.subr.mxu0 0.0
    %740 = vmatpush1.msra.mxu0 %v685
    %741 = vmatprep.subr.mxu0 0.0
    %742 = vmatpush1.msra.mxu0 %v686
    %743 = vmatprep.subr.mxu0 0.0
    %744 = vmatpush1.msra.mxu0 0.0
    %745 = vmatprep.subr.mxu0 0.0
    %746 = vmatpush1.msra.mxu0 0.0
    %747 = vmatprep.subr.mxu0 0.0
    %748 = vmatpush1.msra.mxu0 0.0
    %749 = vmatprep.subr.mxu0 0.0
    %750 = vmatpush1.msra.mxu0 0.0
    %751 = vmatprep.subr.mxu0 0.0
    %752 = vmatpush1.msra.mxu0 0.0
    %753 = vmatprep.subr.mxu0 0.0
    %754 = vmatpush1.msra.mxu0 0.0
    %755 = vmatprep.subr.mxu0 0.0
    %756 = vmatpush1.msra.mxu0 0.0
    %757 = vmatprep.subr.mxu0 0.0
    %758 = vmatpush1.msra.mxu0 0.0
    %759 = vmatprep.subr.mxu0 0.0
    %760 = vmatpush1.msra.mxu0 0.0
    %761 = vmatprep.subr.mxu0 0.0
    %762 = vmatpush1.msra.mxu0 0.0
    %763 = vmatprep.subr.mxu0 0.0
    %764 = vmatpush1.msra.mxu0 0.0
    %765 = vmatprep.subr.mxu0 0.0
    %766 = vmatpush1.msra.mxu0 0.0
    %767 = vmatprep.subr.mxu0 0.0
    %768 = vmatpush1.msra.mxu0 0.0
    %769 = vmatprep.subr.mxu0 0.0
    %770 = vmatpush1.msra.mxu0 0.0
    %771 = vmatprep.subr.mxu0 0.0
    %772 = vmatpush1.msra.mxu0 0.0
    %773 = vmatprep.subr.mxu0 0.0
    %774 = vmatpush1.msra.mxu0 0.0
    %775 = vmatprep.subr.mxu0 0.0
    %776 = vmatpush1.msra.mxu0 0.0
    %777 = vmatprep.subr.mxu0 0.0
    %778 = vmatpush1.msra.mxu0 0.0
    %779 = vmatprep.subr.mxu0 0.0
    %780 = vmatpush1.msra.mxu0 0.0
    %781 = vmatprep.subr.mxu0 0.0
    %782 = vmatpush1.msra.mxu0 0.0
    %783 = vmatprep.subr.mxu0 0.0
    %784 = vmatpush1.msra.mxu0 0.0
    %785 = vmatprep.subr.mxu0 0.0
    %786 = vmatpush1.msra.mxu0 0.0
    %787 = vmatprep.subr.mxu0 0.0
    %788 = vmatpush1.msra.mxu0 0.0
    %789 = vmatprep.mubr.f32.mxu0 0.0
    %790 = vmatmul.mubr.f32.gmra.mrb[0].mxu0 %v696
    %v791 = vpop.f32.mrb[0].mxu0
    %v792 = vadd.f32 %v692, %v791
    %v793 = vpop.f32.mrb[0].mxu0
    %794 = vmatprep.mubr.f32.mxu0 0.0
    %795 = vmatmul.mubr.f32.gmra.mrb[0].mxu0 %v699
    %v796 = vpop.f32.mrb[0].mxu0
    %v797 = vadd.f32 %v692, %v796
    %v798 = vpop.f32.mrb[0].mxu0
    %799 = vmatprep.mubr.f32.mxu0 0.0
    %800 = vmatmul.mubr.f32.gmra.mrb[0].mxu0 %v702
    %v801 = vpop.f32.mrb[0].mxu0
    %v802 = vadd.f32 %v692, %v801
    %v803 = vpop.f32.mrb[0].mxu0
    %804 = vmatprep.mubr.f32.mxu0 0.0
    %805 = vmatmul.mubr.f32.gmra.mrb[0].mxu0 %v705
    %v806 = vpop.f32.mrb[0].mxu0
    %v807 = vadd.f32 %v692, %v806
    %v808 = vpop.f32.mrb[0].mxu0
    %809 = vmatprep.mubr.f32.mxu0 0.0
    %810 = vmatmul.mubr.f32.gmra.mrb[0].mxu0 %v708
    %v811 = vpop.f32.mrb[0].mxu0
    %v812 = vadd.f32 %v692, %v811
    %v813 = vpop.f32.mrb[0].mxu0
    %814 = vmatprep.mubr.f32.mxu0 0.0
    %815 = vmatmul.mubr.f32.gmra.mrb[0].mxu0 %v711
    %v816 = vpop.f32.mrb[0].mxu0
    %v817 = vadd.f32 %v692, %v816
    %v818 = vpop.f32.mrb[0].mxu0
    %819 = vmatprep.mubr.f32.mxu0 0.0
    %820 = vmatmul.mubr.f32.gmra.mrb[0].mxu0 %v714
    %v821 = vpop.f32.mrb[0].mxu0
    %v822 = vadd.f32 %v692, %v821
    %v823 = vpop.f32.mrb[0].mxu0
    %824 = vmatprep.mubr.f32.mxu0 0.0
    %825 = vmatmul.mubr.f32.gmra.mrb[0].mxu0 %v717
    %v826 = vpop.f32.mrb[0].mxu0
    %v827 = vadd.f32 %v692, %v826
    %v828 = vpop.f32.mrb[0].mxu0
    %829 = vmatprep.mubr.f32.mxu0 0.0
    %830 = vmatmul.mubr.f32.gmra.mrb[0].mxu0 %v720
    %v831 = vpop.f32.mrb[0].mxu0
    %v832 = vadd.f32 %v692, %v831
    %v833 = vpop.f32.mrb[0].mxu0
    %834 = vmatprep.mubr.f32.mxu0 0.0
    %835 = vmatmul.mubr.f32.gmra.mrb[0].mxu0 %v723
    %v836 = vpop.f32.mrb[0].mxu0
    %v837 = vadd.f32 %v692, %v836
    %v838 = vpop.f32.mrb[0].mxu0
    %839 = vdwg.mxu0
    %v840 = vmax.f32 %v792, 0.0
    %v841 = vmax.f32 %v797, 0.0
    %v842 = vmax.f32 %v802, 0.0
    %v843 = vmax.f32 %v807, 0.0
    %v844 = vmax.f32 %v812, 0.0
    %v845 = vmax.f32 %v817, 0.0
    %v846 = vmax.f32 %v822, 0.0
    %v847 = vmax.f32 %v827, 0.0
    %v848 = vmax.f32 %v832, 0.0
    %v849 = vmax.f32 %v837, 0.0
    %850 = vst.msk [vmem:[#allocation3] sm:$0xff] %vm602, %v840
    %851 = vst.msk [vmem:[#allocation3 + $0x8] sm:$0xff] %vm602, %v841
    %852 = vst.msk [vmem:[#allocation3 + $0x10] sm:$0xff] %vm602, %v842
    %853 = vst.msk [vmem:[#allocation3 + $0x18] sm:$0xff] %vm602, %v843
    %854 = vst.msk [vmem:[#allocation3 + $0x20] sm:$0xff] %vm602, %v844
    %855 = vst.msk [vmem:[#allocation3 + $0x28] sm:$0xff] %vm602, %v845
    %856 = vst.msk [vmem:[#allocation3 + $0x30] sm:$0xff] %vm602, %v846
    %857 = vst.msk [vmem:[#allocation3 + $0x38] sm:$0xff] %vm602, %v847
    %858 = vst.msk [vmem:[#allocation3 + $0x40] sm:$0xff] %vm602, %v848
    %859 = vst.msk [vmem:[#allocation3 + $0x48] sm:$0xff] %vm602, %v849
    %v860 = vld [vmem:[#allocation3] sm:$0x3]
    %v861 = vld [vmem:[#allocation3 + $0x2] sm:$0x3]
    %v862 = vld [vmem:[#allocation3 + $0x4] sm:$0x3]
    %v863 = vld [vmem:[#allocation3 + $0x6] sm:$0x3]
    %v864 = vld [vmem:[#allocation3 + $0x8] sm:$0x3]
    %v865 = vld [vmem:[#allocation3 + $0x10] sm:$0x3]
    %v866 = vld [vmem:[#allocation3 + $0x12] sm:$0x3]
    %v867 = vld [vmem:[#allocation3 + $0x14] sm:$0x3]
    %v868 = vld [vmem:[#allocation3 + $0x16] sm:$0x3]
    %v869 = vld [vmem:[#allocation3 + $0x18] sm:$0x3]
    %v870 = vld [vmem:[#allocation3 + $0x20] sm:$0x3]
    %v871 = vld [vmem:[#allocation3 + $0x22] sm:$0x3]
    %v872 = vld [vmem:[#allocation3 + $0x24] sm:$0x3]
    %v873 = vld [vmem:[#allocation3 + $0x26] sm:$0x3]
    %v874 = vld [vmem:[#allocation3 + $0x28] sm:$0x3]
    %v875 = vld [vmem:[#allocation3 + $0x30] sm:$0x3]
    %v876 = vld [vmem:[#allocation3 + $0x32] sm:$0x3]
    %v877 = vld [vmem:[#allocation3 + $0x34] sm:$0x3]
    %v878 = vld [vmem:[#allocation3 + $0x36] sm:$0x3]
    %v879 = vld [vmem:[#allocation3 + $0x38] sm:$0x3]
    %v880 = vld [vmem:[#allocation3 + $0x40] sm:$0x3]
    %v881 = vld [vmem:[#allocation3 + $0x42] sm:$0x3]
    %v882 = vld [vmem:[#allocation3 + $0x44] sm:$0x3]
    %v883 = vld [vmem:[#allocation3 + $0x46] sm:$0x3]
    %v884 = vld [vmem:[#allocation3 + $0x48] sm:$0x3]
    %886 = vrot.lane.b32.xlu0 %v861, 16
    %v887 = vpop.permute.xlu0 %886
    %890 = vrot.lane.b32.xlu0 %v862, 32
    %v891 = vpop.permute.xlu0 %890
    %894 = vrot.lane.b32.xlu0 %v863, 48
    %v895 = vpop.permute.xlu0 %894
    %898 = vrot.lane.b32.xlu0 %v864, 64
    %v899 = vpop.permute.xlu0 %898
    %902 = vrot.lane.b32.xlu0 %v865, 80
    %v903 = vpop.permute.xlu0 %902
    %906 = vrot.lane.b32.xlu0 %v866, 96
    %v907 = vpop.permute.xlu0 %906
    %910 = vrot.lane.b32.xlu0 %v867, 112
    %v911 = vpop.permute.xlu0 %910
    %914 = vrot.lane.b32.xlu0 %v869, 16
    %v915 = vpop.permute.xlu0 %914
    %918 = vrot.lane.b32.xlu0 %v870, 32
    %v919 = vpop.permute.xlu0 %918
    %922 = vrot.lane.b32.xlu0 %v871, 48
    %v923 = vpop.permute.xlu0 %922
    %926 = vrot.lane.b32.xlu0 %v872, 64
    %v927 = vpop.permute.xlu0 %926
    %930 = vrot.lane.b32.xlu0 %v873, 80
    %v931 = vpop.permute.xlu0 %930
    %934 = vrot.lane.b32.xlu0 %v874, 96
    %v935 = vpop.permute.xlu0 %934
    %938 = vrot.lane.b32.xlu0 %v875, 112
    %v939 = vpop.permute.xlu0 %938
    %v941 = vsel %vm602, %v860, %v887
    %v942 = vsel %vm624, %v941, %v891
    %v943 = vsel %vm646, %v942, %v895
    %v944 = vsel %vm62, %v943, %v899
    %vm945 = vcmask 654336
    %v946 = vsel %vm945, %v944, %v903
    %vm947 = vcmask 785408
    %v948 = vsel %vm947, %v946, %v907
    %vm949 = vcmask 916480
    %v950 = vsel %vm949, %v948, %v911
    %v951 = vsel %vm602, %v868, %v915
    %v952 = vsel %vm624, %v951, %v919
    %v953 = vsel %vm646, %v952, %v923
    %v954 = vsel %vm62, %v953, %v927
    %v955 = vsel %vm945, %v954, %v931
    %v956 = vsel %vm947, %v955, %v935
    %v957 = vsel %vm949, %v956, %v939
    %959 = vrot.lane.b32.xlu0 %v877, 16
    %v960 = vpop.permute.xlu0 %959
    %963 = vrot.lane.b32.xlu0 %v878, 32
    %v964 = vpop.permute.xlu0 %963
    %967 = vrot.lane.b32.xlu0 %v879, 48
    %v968 = vpop.permute.xlu0 %967
    %971 = vrot.lane.b32.xlu0 %v880, 64
    %v972 = vpop.permute.xlu0 %971
    %975 = vrot.lane.b32.xlu0 %v881, 80
    %v976 = vpop.permute.xlu0 %975
    %979 = vrot.lane.b32.xlu0 %v882, 96
    %v980 = vpop.permute.xlu0 %979
    %983 = vrot.lane.b32.xlu0 %v883, 112
    %v984 = vpop.permute.xlu0 %983
    %v986 = vsel %vm602, %v876, %v960
    %v987 = vsel %vm624, %v986, %v964
    %v988 = vsel %vm646, %v987, %v968
    %v989 = vsel %vm62, %v988, %v972
    %v990 = vsel %vm945, %v989, %v976
    %v991 = vsel %vm947, %v990, %v980
    %v992 = vsel %vm949, %v991, %v984
    %v993 = vld [vmem:[%s5] sm:$0xff]
    %v994 = vld [vmem:[%s5 + $0x8] sm:$0xff]
    %v995 = vld [vmem:[%s5 + $0x10] sm:$0xff]
    %v996 = vld [vmem:[%s5 + $0x18] sm:$0xff]
    %v997 = vld [vmem:[%s5 + $0x20] sm:$0xff]
    %v998 = vld [vmem:[%s5 + $0x28] sm:$0xff]
    %v999 = vld [vmem:[%s5 + $0x30] sm:$0xff]
    %v1000 = vld [vmem:[%s5 + $0x38] sm:$0xff]
    %v1001 = vld [vmem:[%s5 + $0x40] sm:$0xff]
    %v1002 = vld [vmem:[%s5 + $0x48] sm:$0xff]
    %v1003 = vld [vmem:[%s5 + $0x50] sm:$0xff]
    %v1004 = vld [vmem:[%s5 + $0x58] sm:$0xff]
    %v1005 = vld [vmem:[%s5 + $0x60] sm:$0xff]
    %v1006 = vld [vmem:[%s5 + $0x68] sm:$0xff]
    %v1007 = vld [vmem:[%s5 + $0x70] sm:$0xff]
    %v1008 = vld [vmem:[%s5 + $0x78] sm:$0xff]
    %v1009 = vld [vmem:[%s5 + $0x80] sm:$0xff]
    %v1010 = vld [vmem:[%s5 + $0x88] sm:$0xff]
    %v1011 = vld [vmem:[%s5 + $0x90] sm:$0xff]
    %v1012 = vld [vmem:[%s5 + $0x98] sm:$0xff]
    %v1013 = vld [vmem:[%s5 + $0xa0] sm:$0xff]
    %v1014 = vld [vmem:[%s5 + $0xa8] sm:$0xff]
    %v1015 = vld [vmem:[%s5 + $0xb0] sm:$0xff]
    %v1016 = vld [vmem:[%s5 + $0xb8] sm:$0xff]
    %v1017 = vld [vmem:[%s5 + $0xc0] sm:$0xff]
    %v1018 = vld [vmem:[%s5 + $0xc8] sm:$0xff]
    %v1019 = vld [vmem:[%s5 + $0xd0] sm:$0xff]
    %v1020 = vld [vmem:[%s5 + $0xd8] sm:$0xff]
    %v1021 = vld [vmem:[%s5 + $0xe0] sm:$0xff]
    %v1022 = vld [vmem:[%s5 + $0xe8] sm:$0xff]
    %v1023 = vld [vmem:[%s5 + $0xf0] sm:$0xff]
    %v1024 = vld [vmem:[%s5 + $0xf8] sm:$0xff]
    %v1025 = vld [vmem:[%s5 + $0x100] sm:$0xff]
    %v1026 = vld [vmem:[%s5 + $0x108] sm:$0xff]
    %v1027 = vld [vmem:[%s5 + $0x110] sm:$0xff]
    %v1028 = vld [vmem:[%s5 + $0x118] sm:$0xff]
    %v1029 = vld [vmem:[%s5 + $0x120] sm:$0xff]
    %v1030 = vld [vmem:[%s5 + $0x128] sm:$0xff]
    %v1031 = vld [vmem:[%s5 + $0x130] sm:$0xff]
    %v1032 = vld [vmem:[%s5 + $0x138] sm:$0xff]
    %v1033 = vld [vmem:[%s5 + $0x140] sm:$0xff]
    %v1034 = vld [vmem:[%s5 + $0x148] sm:$0xff]
    %v1035 = vld [vmem:[%s5 + $0x150] sm:$0xff]
    %v1036 = vld [vmem:[%s5 + $0x158] sm:$0xff]
    %v1037 = vld [vmem:[%s5 + $0x160] sm:$0xff]
    %v1038 = vld [vmem:[%s5 + $0x168] sm:$0xff]
    %v1039 = vld [vmem:[%s5 + $0x170] sm:$0xff]
    %v1040 = vld [vmem:[%s5 + $0x178] sm:$0xff]
    %v1041 = vld [vmem:[%s5 + $0x180] sm:$0xff]
    %v1042 = vld [vmem:[%s5 + $0x188] sm:$0xff]
    %v1043 = vld [vmem:[%s6] sm:$0x1]
    %v1045 = vlaneseq
    %v1046 = vshrl.u32 %v1045, 7
    %v1047 = vsub.s32 0, %v1046
    %v1048 = vrot.slane %v1043, %v1047
    %v1051 = vsel %vm602, %v884, 0
    %1053 = vmatprep.subr.mxu0 0.0
    %1054 = vmatpush1.msra.mxu0 %v993
    %1055 = vmatprep.subr.mxu0 0.0
    %1056 = vmatpush1.msra.mxu0 %v994
    %1057 = vmatprep.subr.mxu0 0.0
    %1058 = vmatpush1.msra.mxu0 %v995
    %1059 = vmatprep.subr.mxu0 0.0
    %1060 = vmatpush1.msra.mxu0 %v996
    %1061 = vmatprep.subr.mxu0 0.0
    %1062 = vmatpush1.msra.mxu0 %v997
    %1063 = vmatprep.subr.mxu0 0.0
    %1064 = vmatpush1.msra.mxu0 %v998
    %1065 = vmatprep.subr.mxu0 0.0
    %1066 = vmatpush1.msra.mxu0 %v999
    %1067 = vmatprep.subr.mxu0 0.0
    %1068 = vmatpush1.msra.mxu0 %v1000
    %1069 = vmatprep.subr.mxu0 0.0
    %1070 = vmatpush1.msra.mxu0 %v1001
    %1071 = vmatprep.subr.mxu0 0.0
    %1072 = vmatpush1.msra.mxu0 %v1002
    %1073 = vmatprep.subr.mxu0 0.0
    %1074 = vmatpush1.msra.mxu0 %v1003
    %1075 = vmatprep.subr.mxu0 0.0
    %1076 = vmatpush1.msra.mxu0 %v1004
    %1077 = vmatprep.subr.mxu0 0.0
    %1078 = vmatpush1.msra.mxu0 %v1005
    %1079 = vmatprep.subr.mxu0 0.0
    %1080 = vmatpush1.msra.mxu0 %v1006
    %1081 = vmatprep.subr.mxu0 0.0
    %1082 = vmatpush1.msra.mxu0 %v1007
    %1083 = vmatprep.subr.mxu0 0.0
    %1084 = vmatpush1.msra.mxu0 %v1008
    %1085 = vmatprep.subr.mxu0 0.0
    %1086 = vmatpush1.msra.mxu0 %v1009
    %1087 = vmatprep.subr.mxu0 0.0
    %1088 = vmatpush1.msra.mxu0 %v1010
    %1089 = vmatprep.subr.mxu0 0.0
    %1090 = vmatpush1.msra.mxu0 %v1011
    %1091 = vmatprep.subr.mxu0 0.0
    %1092 = vmatpush1.msra.mxu0 %v1012
    %1093 = vmatprep.subr.mxu0 0.0
    %1094 = vmatpush1.msra.mxu0 %v1013
    %1095 = vmatprep.subr.mxu0 0.0
    %1096 = vmatpush1.msra.mxu0 %v1014
    %1097 = vmatprep.subr.mxu0 0.0
    %1098 = vmatpush1.msra.mxu0 %v1015
    %1099 = vmatprep.subr.mxu0 0.0
    %1100 = vmatpush1.msra.mxu0 %v1016
    %1101 = vmatprep.subr.mxu0 0.0
    %1102 = vmatpush1.msra.mxu0 %v1017
    %1103 = vmatprep.subr.mxu0 0.0
    %1104 = vmatpush1.msra.mxu0 %v1018
    %1105 = vmatprep.subr.mxu0 0.0
    %1106 = vmatpush1.msra.mxu0 %v1019
    %1107 = vmatprep.subr.mxu0 0.0
    %1108 = vmatpush1.msra.mxu0 %v1020
    %1109 = vmatprep.subr.mxu0 0.0
    %1110 = vmatpush1.msra.mxu0 %v1021
    %1111 = vmatprep.subr.mxu0 0.0
    %1112 = vmatpush1.msra.mxu0 %v1022
    %1113 = vmatprep.subr.mxu0 0.0
    %1114 = vmatpush1.msra.mxu0 %v1023
    %1115 = vmatprep.subr.mxu0 0.0
    %1116 = vmatpush1.msra.mxu0 %v1024
    %1117 = vmatprep.mubr.f32.mxu0 %v957
    %1118 = vmatmul.mubr.f32.gmra.mrb[0].mxu0 %v950
    %v1119 = vpop.f32.mrb[0].mxu0
    %v1120 = vadd.f32 %v1048, %v1119
    %v1121 = vpop.f32.mrb[0].mxu0
    %1122 = vdwg.mxu0
    %1123 = vmatprep.subr.mxu0 0.0
    %1124 = vmatpush1.msra.mxu0 %v1025
    %1125 = vmatprep.subr.mxu0 0.0
    %1126 = vmatpush1.msra.mxu0 %v1026
    %1127 = vmatprep.subr.mxu0 0.0
    %1128 = vmatpush1.msra.mxu0 %v1027
    %1129 = vmatprep.subr.mxu0 0.0
    %1130 = vmatpush1.msra.mxu0 %v1028
    %1131 = vmatprep.subr.mxu0 0.0
    %1132 = vmatpush1.msra.mxu0 %v1029
    %1133 = vmatprep.subr.mxu0 0.0
    %1134 = vmatpush1.msra.mxu0 %v1030
    %1135 = vmatprep.subr.mxu0 0.0
    %1136 = vmatpush1.msra.mxu0 %v1031
    %1137 = vmatprep.subr.mxu0 0.0
    %1138 = vmatpush1.msra.mxu0 %v1032
    %1139 = vmatprep.subr.mxu0 0.0
    %1140 = vmatpush1.msra.mxu0 %v1033
    %1141 = vmatprep.subr.mxu0 0.0
    %1142 = vmatpush1.msra.mxu0 %v1034
    %1143 = vmatprep.subr.mxu0 0.0
    %1144 = vmatpush1.msra.mxu0 %v1035
    %1145 = vmatprep.subr.mxu0 0.0
    %1146 = vmatpush1.msra.mxu0 %v1036
    %1147 = vmatprep.subr.mxu0 0.0
    %1148 = vmatpush1.msra.mxu0 %v1037
    %1149 = vmatprep.subr.mxu0 0.0
    %1150 = vmatpush1.msra.mxu0 %v1038
    %1151 = vmatprep.subr.mxu0 0.0
    %1152 = vmatpush1.msra.mxu0 %v1039
    %1153 = vmatprep.subr.mxu0 0.0
    %1154 = vmatpush1.msra.mxu0 %v1040
    %1155 = vmatprep.subr.mxu0 0.0
    %1156 = vmatpush1.msra.mxu0 %v1041
    %1157 = vmatprep.subr.mxu0 0.0
    %1158 = vmatpush1.msra.mxu0 %v1042
    %1159 = vmatprep.subr.mxu0 0.0
    %1160 = vmatpush1.msra.mxu0 0.0
    %1161 = vmatprep.subr.mxu0 0.0
    %1162 = vmatpush1.msra.mxu0 0.0
    %1163 = vmatprep.subr.mxu0 0.0
    %1164 = vmatpush1.msra.mxu0 0.0
    %1165 = vmatprep.subr.mxu0 0.0
    %1166 = vmatpush1.msra.mxu0 0.0
    %1167 = vmatprep.subr.mxu0 0.0
    %1168 = vmatpush1.msra.mxu0 0.0
    %1169 = vmatprep.subr.mxu0 0.0
    %1170 = vmatpush1.msra.mxu0 0.0
    %1171 = vmatprep.subr.mxu0 0.0
    %1172 = vmatpush1.msra.mxu0 0.0
    %1173 = vmatprep.subr.mxu0 0.0
    %1174 = vmatpush1.msra.mxu0 0.0
    %1175 = vmatprep.subr.mxu0 0.0
    %1176 = vmatpush1.msra.mxu0 0.0
    %1177 = vmatprep.subr.mxu0 0.0
    %1178 = vmatpush1.msra.mxu0 0.0
    %1179 = vmatprep.subr.mxu0 0.0
    %1180 = vmatpush1.msra.mxu0 0.0
    %1181 = vmatprep.subr.mxu0 0.0
    %1182 = vmatpush1.msra.mxu0 0.0
    %1183 = vmatprep.subr.mxu0 0.0
    %1184 = vmatpush1.msra.mxu0 0.0
    %1185 = vmatprep.subr.mxu0 0.0
    %1186 = vmatpush1.msra.mxu0 0.0
    %1187 = vmatprep.mubr.f32.mxu0 %v1051
    %1188 = vmatmul.mubr.f32.gmra.mrb[0].mxu0 %v992
    %v1189 = vpop.f32.mrb[0].mxu0
    %v1190 = vadd.f32 %v1120, %v1189
    %v1191 = vpop.f32.mrb[0].mxu0
    %1192 = vdwg.mxu0
    %v1193 = vmax.f32 %v1190, 0.0
    %v1194 = vld [vmem:[%s7] sm:$0xff]
    %v1195 = vld [vmem:[%s7 + $0x8] sm:$0xff]
    %v1196 = vld [vmem:[%s7 + $0x10] sm:$0xff]
    %v1197 = vld [vmem:[%s7 + $0x18] sm:$0xff]
    %v1198 = vld [vmem:[%s8] sm:$0x1]
    %v1200 = vlaneseq
    %v1201 = vshrl.u32 %v1200, 7
    %v1202 = vsub.s32 0, %v1201
    %v1203 = vrot.slane %v1198, %v1202
    %v1206 = vsel %vm624, %v1193, 0
    %1208 = vmatprep.subr.mxu0 0.0
    %1209 = vmatpush1.msra.mxu0 %v1194
    %1210 = vmatprep.subr.mxu0 0.0
    %1211 = vmatpush1.msra.mxu0 %v1195
    %1212 = vmatprep.subr.mxu0 0.0
    %1213 = vmatpush1.msra.mxu0 %v1196
    %1214 = vmatprep.subr.mxu0 0.0
    %1215 = vmatpush1.msra.mxu0 %v1197
    %1216 = vmatprep.subr.mxu0 0.0
    %1217 = vmatpush1.msra.mxu0 0.0
    %1218 = vmatprep.subr.mxu0 0.0
    %1219 = vmatpush1.msra.mxu0 0.0
    %1220 = vmatprep.subr.mxu0 0.0
    %1221 = vmatpush1.msra.mxu0 0.0
    %1222 = vmatprep.subr.mxu0 0.0
    %1223 = vmatpush1.msra.mxu0 0.0
    %1224 = vmatprep.subr.mxu0 0.0
    %1225 = vmatpush1.msra.mxu0 0.0
    %1226 = vmatprep.subr.mxu0 0.0
    %1227 = vmatpush1.msra.mxu0 0.0
    %1228 = vmatprep.subr.mxu0 0.0
    %1229 = vmatpush1.msra.mxu0 0.0
    %1230 = vmatprep.subr.mxu0 0.0
    %1231 = vmatpush1.msra.mxu0 0.0
    %1232 = vmatprep.subr.mxu0 0.0
    %1233 = vmatpush1.msra.mxu0 0.0
    %1234 = vmatprep.subr.mxu0 0.0
    %1235 = vmatpush1.msra.mxu0 0.0
    %1236 = vmatprep.subr.mxu0 0.0
    %1237 = vmatpush1.msra.mxu0 0.0
    %1238 = vmatprep.subr.mxu0 0.0
    %1239 = vmatpush1.msra.mxu0 0.0
    %1240 = vmatprep.subr.mxu0 0.0
    %1241 = vmatpush1.msra.mxu0 0.0
    %1242 = vmatprep.subr.mxu0 0.0
    %1243 = vmatpush1.msra.mxu0 0.0
    %1244 = vmatprep.subr.mxu0 0.0
    %1245 = vmatpush1.msra.mxu0 0.0
    %1246 = vmatprep.subr.mxu0 0.0
    %1247 = vmatpush1.msra.mxu0 0.0
    %1248 = vmatprep.subr.mxu0 0.0
    %1249 = vmatpush1.msra.mxu0 0.0
    %1250 = vmatprep.subr.mxu0 0.0
    %1251 = vmatpush1.msra.mxu0 0.0
    %1252 = vmatprep.subr.mxu0 0.0
    %1253 = vmatpush1.msra.mxu0 0.0
    %1254 = vmatprep.subr.mxu0 0.0
    %1255 = vmatpush1.msra.mxu0 0.0
    %1256 = vmatprep.subr.mxu0 0.0
    %1257 = vmatpush1.msra.mxu0 0.0
    %1258 = vmatprep.subr.mxu0 0.0
    %1259 = vmatpush1.msra.mxu0 0.0
    %1260 = vmatprep.subr.mxu0 0.0
    %1261 = vmatpush1.msra.mxu0 0.0
    %1262 = vmatprep.subr.mxu0 0.0
    %1263 = vmatpush1.msra.mxu0 0.0
    %1264 = vmatprep.subr.mxu0 0.0
    %1265 = vmatpush1.msra.mxu0 0.0
    %1266 = vmatprep.subr.mxu0 0.0
    %1267 = vmatpush1.msra.mxu0 0.0
    %1268 = vmatprep.subr.mxu0 0.0
    %1269 = vmatpush1.msra.mxu0 0.0
    %1270 = vmatprep.subr.mxu0 0.0
    %1271 = vmatpush1.msra.mxu0 0.0
    %1272 = vmatprep.mubr.f32.mxu0 0.0
    %1273 = vmatmul.mubr.f32.gmra.mrb[0].mxu0 %v1206
    %v1274 = vpop.f32.mrb[0].mxu0
    %v1275 = vadd.f32 %v1203, %v1274
    %v1276 = vpop.f32.mrb[0].mxu0
    %1277 = vdwg.mxu0
    %1278 = vst [vmem:[#allocation4] sm:$0x3] %v1275
    // Predicated region
    $region38: #{dqn_fused_forward.1} parent=1 // pred_check
      _
    $region39: #{dqn_fused_forward.1} parent=1 // pred_check_branch
      %1280 = sbr.rel (0) target = $region41
    $region40: #{dqn_fused_forward.1} parent=1 // pred_region
      %s1282 = ssub.s32 32, 32
      %1283 = vsyncadd [#allocation5], %s1282
      %s1285 = sshll.u32 [#allocation4], 4
      %s1286 = int_to_ptr.vmem [resolvable:$true] %s1285
      %1288 = dma.vmem_to_hbm [thread:$0]  %s1286, 32, %s9, [#allocation5]
    $region41: #{dqn_fused_forward.1} parent=1 // pred_fallthru
      _
    // Predicated region
    $region42: #{dqn_fused_forward.1} parent=1 // pred_check
      _
    $region43: #{dqn_fused_forward.1} parent=1 // pred_check_branch
      %1290 = sbr.rel (0) target = $region45
    $region44: #{dqn_fused_forward.1} parent=1 // pred_region
      %1291 = dma.done [#allocation5], 32
    $region45: #{dqn_fused_forward.1} parent=1 // pred_fallthru
      _
    %1292 = vsyncpa [#allocation5], 1

</llo_original>
